<compile_context>
chip_gen: v5e
topology: v5e:2x2
jax: 0.10.0
libtpu: 0.0.40
codegen_flags: <defaults>
</compile_context>

<pallas_src>
import functools
import math

import jax
import jax.numpy as jnp
from jax.experimental import pallas as pl
from jax.experimental.pallas import tpu as pltpu

_VMEM_LIMIT = 32 * 1024 * 1024  # safe scoped-VMEM budget on v5e/v6e (128 MiB) and v7x (64 MiB)
_LN_EPS = 1e-12                 # espnet LayerNorm eps


def _full_spec(shape):
    """BlockSpec covering the whole (small) array; stays resident in VMEM across the grid."""
    return pl.BlockSpec(shape, lambda *_: (0,) * len(shape))


def _pick_row_tile(n, target=256):
    """Largest row tile that divides n: n itself if small, else a multiple-of-8 divisor."""
    if n <= target:
        return n
    for t in range(target, 7, -8):
        if n % t == 0:
            return t
    return n


def _layernorm(x, g, b, eps):
    mean = jnp.mean(x, axis=-1, keepdims=True)
    var = jnp.mean((x - mean) ** 2, axis=-1, keepdims=True)
    return (x - mean) * jax.lax.rsqrt(var + eps) * g + b


# ----------------------------- generic row-tiled linear (conv / embed path) ------------------

def _linear_kernel(x_ref, w_ref, b_ref, o_ref, *, activation):
    y = jnp.dot(x_ref[...], w_ref[...], preferred_element_type=jnp.float32)
    y = y + b_ref[...]
    if activation == "relu":
        y = jnp.maximum(y, 0.0)
    o_ref[...] = y.astype(o_ref.dtype)


def linear(x, w, b, activation="none"):
    """y = act(x @ w + b), tiled over rows with a parallel grid (weights resident in VMEM)."""
    n, k = x.shape
    k2, m = w.shape
    assert k == k2
    tn = _pick_row_tile(n)
    return pl.pallas_call(
        functools.partial(_linear_kernel, activation=activation),
        out_shape=jax.ShapeDtypeStruct((n, m), jnp.float32),
        grid=(n // tn,),
        in_specs=[pl.BlockSpec((tn, k), lambda i: (i, 0)),
                  _full_spec((k, m)),
                  _full_spec((1, m))],
        out_specs=pl.BlockSpec((tn, m), lambda i: (i, 0)),
        compiler_params=pltpu.CompilerParams(
            dimension_semantics=("parallel",), vmem_limit_bytes=_VMEM_LIMIT),
    )(x, w, b.reshape(1, m))


# ----------------------------- fused encoder layer (attn + FF) -------------------------------

def _encoder_layer_kernel(x_ref, m_ref,
                          g1_ref, b1_ref, qkvw_ref, qkvb_ref, ow_ref, ob_ref,
                          g2_ref, b2_ref, w1_ref, fb1_ref, w2_ref, fb2_ref,
                          o_ref, *, aheads, dk, scale, eps):
    x = x_ref[0]                      # (T, D)  residual input
    mask01 = m_ref[0]                 # (1, T): 1.0 = valid key, 0.0 = pad

    # ---- self-attention sub-block (normalize_before=True) ----
    xn = _layernorm(x, g1_ref[...], b1_ref[...], eps)
    # Fused QKV projection: one lane-dense (T, 3D) matmul instead of three D-wide ones.
    qkv = jnp.dot(xn, qkvw_ref[...], preferred_element_type=jnp.float32) + qkvb_ref[...]
    d = aheads * dk
    bias = (mask01 - 1.0) * 1e30      # additive mask: 0 on valid keys, -1e30 on padding
    ctx_parts = []
    for h in range(aheads):           # statically unrolled; all heads in this grid step
        q = qkv[:, h * dk:(h + 1) * dk] * scale              # scale folded into q (cheaper than on (T,T))
        k = qkv[:, d + h * dk:d + (h + 1) * dk]
        v = qkv[:, 2 * d + h * dk:2 * d + (h + 1) * dk]
        s = jnp.dot(q, k.T, preferred_element_type=jnp.float32) + bias       # (T, T)
        smax = jnp.max(s, axis=-1, keepdims=True)
        e = jnp.exp(s - smax)
        p = e * pl.reciprocal(jnp.sum(e, axis=-1, keepdims=True), approx=True)
        p = p * mask01                # exact masked_fill(mask == 0, 0.0) semantics
        ctx_parts.append(jnp.dot(p, v, preferred_element_type=jnp.float32))
    ctx = jnp.concatenate(ctx_parts, axis=-1)                                # (T, D)
    x1 = x + jnp.dot(ctx, ow_ref[...], preferred_element_type=jnp.float32) + ob_ref[...]

    # ---- feed-forward sub-block (normalize_before=True) ----
    xn2 = _layernorm(x1, g2_ref[...], b2_ref[...], eps)
    hdn = jnp.dot(xn2, w1_ref[...], preferred_element_type=jnp.float32) + fb1_ref[...]
    hdn = jnp.maximum(hdn, 0.0)
    y = jnp.dot(hdn, w2_ref[...], preferred_element_type=jnp.float32) + fb2_ref[...]
    o_ref[0] = x1 + y                 # residual add fused in-kernel


def encoder_layer(x, mask_f, lp, adim, aheads, eunits):
    b, t, d = x.shape
    dk = adim // aheads
    mask3 = mask_f.reshape(b, 1, t)
    kern = functools.partial(_encoder_layer_kernel, aheads=aheads, dk=dk,
                             scale=1.0 / math.sqrt(dk), eps=_LN_EPS)
    return pl.pallas_call(
        kern,
        out_shape=jax.ShapeDtypeStruct((b, t, d), jnp.float32),
        grid=(b,),
        in_specs=[pl.BlockSpec((1, t, d), lambda i: (i, 0, 0)),
                  pl.BlockSpec((1, 1, t), lambda i: (i, 0, 0)),
                  _full_spec((1, d)), _full_spec((1, d)),
                  _full_spec((d, 3 * d)), _full_spec((1, 3 * d)),
                  _full_spec((d, d)), _full_spec((1, d)),
                  _full_spec((1, d)), _full_spec((1, d)),
                  _full_spec((d, eunits)), _full_spec((1, eunits)),
                  _full_spec((eunits, d)), _full_spec((1, d))],
        out_specs=pl.BlockSpec((1, t, d), lambda i: (i, 0, 0)),
        compiler_params=pltpu.CompilerParams(
            dimension_semantics=("parallel",), vmem_limit_bytes=_VMEM_LIMIT),
    )(x, mask3,
      lp["norm1_g"].reshape(1, d), lp["norm1_b"].reshape(1, d),
      lp["qkv_w"], lp["qkv_b"].reshape(1, 3 * d),
      lp["o_w"], lp["o_b"].reshape(1, d),
      lp["norm2_g"].reshape(1, d), lp["norm2_b"].reshape(1, d),
      lp["ff1_w"], lp["ff1_b"].reshape(1, eunits),
      lp["ff2_w"], lp["ff2_b"].reshape(1, d))


# ----------------------------- fused after_norm + lid_lo + label-smoothing loss --------------

def _final_loss_kernel(x_ref, t_ref, g_ref, b_ref, w_ref, lb_ref, o_ref,
                       acc_kl, acc_cnt, *, eps, confidence, low, neg_entropy,
                       padding_idx, normalize_length, batch_size):
    @pl.when(pl.program_id(0) == 0)
    def _():
        acc_kl[...] = jnp.zeros_like(acc_kl)
        acc_cnt[...] = jnp.zeros_like(acc_cnt)

    x = x_ref[...]                                   # (tn, D)
    tgt = t_ref[...]                                 # (tn, 1) int32
    xn = _layernorm(x, g_ref[...], b_ref[...], eps)  # after_norm
    logits = jnp.dot(xn, w_ref[...], preferred_element_type=jnp.float32) + lb_ref[...]  # lid_lo
    n, v = logits.shape
    # log_softmax
    m = jnp.max(logits, axis=-1, keepdims=True)
    z = logits - m
    logp = z - jnp.log(jnp.sum(jnp.exp(z), axis=-1, keepdims=True))
    ignore = tgt == padding_idx
    tgt_c = jnp.where(ignore, 0, tgt)
    col = jax.lax.broadcasted_iota(jnp.int32, (n, v), 1)
    logp_t = jnp.sum(jnp.where(col == tgt_c, logp, 0.0), axis=-1, keepdims=True)
    sum_logp = jnp.sum(logp, axis=-1, keepdims=True)
    # KL(true_dist || softmax) per row: sum td*log(td) is a compile-time constant (neg_entropy),
    # sum td*logp = low*sum(logp) + (confidence-low)*logp[target].
    cross = low * sum_logp + (confidence - low) * logp_t
    valid = jnp.where(ignore, 0.0, 1.0)
    acc_kl[...] += jnp.sum((neg_entropy - cross) * valid, keepdims=True)
    acc_cnt[...] += jnp.sum(valid, keepdims=True)

    @pl.when(pl.program_id(0) == pl.num_programs(0) - 1)
    def _():
        if normalize_length:
            denom = jnp.maximum(acc_cnt[...], 1.0)   # guard: all-padding batch -> no inf/nan
        else:
            denom = jnp.float32(batch_size)
        o_ref[...] = acc_kl[...] / denom


def final_norm_proj_loss(hs_flat, targets, params, odim, smoothing,
                         padding_idx, normalize_length, batch_size):
    n, d = hs_flat.shape
    tn = _pick_row_tile(n)
    confidence = 1.0 - smoothing
    low = smoothing / (odim - 1) if odim > 1 else 0.0
    neg_ent = 0.0
    if confidence > 0.0:
        neg_ent += confidence * math.log(confidence)
    if low > 0.0:
        neg_ent += (odim - 1) * low * math.log(low)
    kern = functools.partial(_final_loss_kernel, eps=_LN_EPS, confidence=confidence,
                             low=low, neg_entropy=neg_ent, padding_idx=padding_idx,
                             normalize_length=normalize_length, batch_size=batch_size)
    loss = pl.pallas_call(
        kern,
        out_shape=jax.ShapeDtypeStruct((1, 1), jnp.float32),
        grid=(n // tn,),
        in_specs=[pl.BlockSpec((tn, d), lambda i: (i, 0)),
                  pl.BlockSpec((tn, 1), lambda i: (i, 0)),
                  _full_spec((1, d)), _full_spec((1, d)),
                  _full_spec((d, odim)), _full_spec((1, odim))],
        out_specs=pl.BlockSpec((1, 1), lambda i: (0, 0)),
        scratch_shapes=[pltpu.VMEM((1, 1), jnp.float32),
                        pltpu.VMEM((1, 1), jnp.float32)],
        compiler_params=pltpu.CompilerParams(
            dimension_semantics=("arbitrary",), vmem_limit_bytes=_VMEM_LIMIT),
    )(hs_flat, targets.reshape(n, 1).astype(jnp.int32),
      params["after_norm_g"].reshape(1, d), params["after_norm_b"].reshape(1, d),
      params["lid_w"], params["lid_b"].reshape(1, odim))
    return loss[0, 0]


# ----------------------------- JAX glue (im2col, PE, model wiring) ---------------------------

def _im2col_1ch(x, kh, kw, stride):
    # x: (B, H, W) single input channel -> patches (B*oh*ow, kh*kw)
    b, h, w = x.shape
    oh = (h - kh) // stride + 1
    ow = (w - kw) // stride + 1
    ih = stride * jnp.arange(oh)[:, None] + jnp.arange(kh)[None, :]
    iw = stride * jnp.arange(ow)[:, None] + jnp.arange(kw)[None, :]
    p = x[:, ih][:, :, :, iw]            # (B, oh, kh, ow, kw)
    p = p.transpose(0, 1, 3, 2, 4)       # (B, oh, ow, kh, kw)
    return p.reshape(b * oh * ow, kh * kw), oh, ow


def _im2col_nchw(x, kh, kw, stride):
    # x: (B, C, H, W) -> patches (B*oh*ow, C*kh*kw) ordered (c, kh, kw)
    b, c, h, w = x.shape
    oh = (h - kh) // stride + 1
    ow = (w - kw) // stride + 1
    ih = stride * jnp.arange(oh)[:, None] + jnp.arange(kh)[None, :]
    iw = stride * jnp.arange(ow)[:, None] + jnp.arange(kw)[None, :]
    p = x[:, :, ih]                      # (B, C, oh, kh, W)
    p = p[:, :, :, :, iw]                # (B, C, oh, kh, ow, kw)
    p = p.transpose(0, 2, 4, 1, 3, 5)    # (B, oh, ow, C, kh, kw)
    return p.reshape(b * oh * ow, c * kh * kw), oh, ow


def positional_encoding(d_model, length):
    position = jnp.arange(length, dtype=jnp.float32)[:, None]
    div_term = jnp.exp(jnp.arange(0, d_model, 2, dtype=jnp.float32)
                       * -(math.log(10000.0) / d_model))
    pe = jnp.zeros((length, d_model), dtype=jnp.float32)
    pe = pe.at[:, 0::2].set(jnp.sin(position * div_term))
    pe = pe.at[:, 1::2].set(jnp.cos(position * div_term))
    return pe


def conv2d_subsampling(x, params, adim):
    # torch: x.unsqueeze(1) -> Conv2d(1,adim,3,2)+ReLU -> Conv2d(adim,adim,3,2)+ReLU -> Linear
    # TODO(synk): conv1's K=9 contraction is MXU-unfriendly on v6e/v7x; could be a VPU pass.
    b, t, f = x.shape
    p1, t1, f1 = _im2col_1ch(x, 3, 3, 2)
    w1 = params["conv1_w"].reshape(adim, 9).T                        # (9, adim)
    y1 = linear(p1, w1, params["conv1_b"], activation="relu")        # (B*t1*f1, adim)
    y1 = y1.reshape(b, t1, f1, adim).transpose(0, 3, 1, 2)           # NCHW
    p2, t2, f2 = _im2col_nchw(y1, 3, 3, 2)
    w2 = params["conv2_w"].reshape(adim, adim * 9).T                 # (adim*9, adim)
    y2 = linear(p2, w2, params["conv2_b"], activation="relu")        # (B*t2*f2, adim)
    y2 = y2.reshape(b, t2, f2, adim)
    # torch: (B,C,t2,f2).transpose(1,2).view(B, t2, C*f2)  -> flatten order (C, f2)
    flat = y2.transpose(0, 1, 3, 2).reshape(b * t2, adim * f2)
    out = linear(flat, params["embed_w"], params["embed_b"])         # (B*t2, adim)
    return out.reshape(b, t2, adim), t2, f2


def e2e_forward(params, xs_pad, ilens, ys_pad, cfg):
    """Mirrors E2E.forward: encoder(conv2d-subsample + transformer) -> lid_lo -> LSM loss."""
    b = xs_pad.shape[0]
    d = cfg["adim"]
    tmax = int(max(ilens))
    xs = xs_pad[:, :tmax]
    ilens_arr = jnp.asarray(ilens)
    src_mask = jnp.arange(tmax)[None, :] < ilens_arr[:, None]        # (B, Tmax) True = valid

    hs, t2, _ = conv2d_subsampling(xs, params, d)
    pe = positional_encoding(d, t2)
    hs = hs * math.sqrt(d) + pe[None]                                # PositionalEncoding (dropout=0)

    # mask[:, :, :-2:2][:, :, :-2:2] subsampling of the key mask
    mask_f = src_mask[:, :-2:2][:, :-2:2].astype(jnp.float32)        # (B, t2)

    for lp in params["layers"]:
        # fused: LN1+QKV+attn+proj+residual+LN2+FF1+ReLU+FF2+residual in one kernel
        hs = encoder_layer(hs, mask_f, lp, d, cfg["aheads"], cfg["eunits"])

    loss = final_norm_proj_loss(hs.reshape(b * t2, d), ys_pad.reshape(-1), params,
                                cfg["odim"], cfg["lsm_weight"], padding_idx=-1,
                                normalize_length=cfg["normalize_length"], batch_size=b)
    # TODO(synk): th_accuracy / chainer Reporter side effects not reproduced (no effect on loss).
    return loss


def make_params(key, idim, adim, eunits, elayers, odim):
    keys = iter(jax.random.split(key, 128))

    def w(shape, scale=0.1):
        return jax.random.normal(next(keys), shape, dtype=jnp.float32) * scale

    f2 = ((idim - 1) // 2 - 1) // 2
    params = {
        "conv1_w": w((adim, 1, 3, 3)), "conv1_b": w((adim,)),
        "conv2_w": w((adim, adim, 3, 3)), "conv2_b": w((adim,)),
        "embed_w": w((adim * f2, adim)), "embed_b": w((adim,)),
        "after_norm_g": jnp.ones((adim,), jnp.float32),
        "after_norm_b": jnp.zeros((adim,), jnp.float32),
        "lid_w": w((adim, odim)), "lid_b": w((odim,)),
        "layers": [],
    }
    for _ in range(elayers):
        q_w, k_w, v_w = w((adim, adim)), w((adim, adim)), w((adim, adim))
        q_b, k_b, v_b = w((adim,)), w((adim,)), w((adim,))
        params["layers"].append({
            "norm1_g": jnp.ones((adim,), jnp.float32), "norm1_b": jnp.zeros((adim,), jnp.float32),
            "norm2_g": jnp.ones((adim,), jnp.float32), "norm2_b": jnp.zeros((adim,), jnp.float32),
            # fused QKV projection (concat of torch linear_q/k/v weights stored as (in, out))
            "qkv_w": jnp.concatenate([q_w, k_w, v_w], axis=1),
            "qkv_b": jnp.concatenate([q_b, k_b, v_b], axis=0),
            "o_w": w((adim, adim)), "o_b": w((adim,)),
            "ff1_w": w((adim, eunits)), "ff1_b": w((eunits,)),
            "ff2_w": w((eunits, adim)), "ff2_b": w((adim,)),
        })
    return params


if __name__ == "__main__":
    cfg = dict(idim=20, adim=32, aheads=4, eunits=48, elayers=2, odim=8,
               lsm_weight=0.1, normalize_length=True)
    B, T = 2, 20
    key = jax.random.PRNGKey(0)
    k1, k2, k3 = jax.random.split(key, 3)

    xs_pad = jax.random.normal(k1, (B, T, cfg["idim"]), dtype=jnp.float32)
    ilens = [20, 16]
    t_sub = ((T - 1) // 2 - 1) // 2                      # subsampled length = 4
    ys_pad = jax.random.randint(k2, (B, t_sub), 0, cfg["odim"])
    ys_pad = ys_pad.at[1, -1].set(-1)                    # one ignored (padding) label

    params = make_params(k3, cfg["idim"], cfg["adim"], cfg["eunits"],
                         cfg["elayers"], cfg["odim"])

    fwd = jax.jit(lambda p, x, y: e2e_forward(p, x, ilens, y, cfg))
    loss = fwd(params, xs_pad, ys_pad)
    jax.block_until_ready(loss)
    assert loss.shape == () and jnp.isfinite(loss)
    print("KERNEL_OK")
</pallas_src>

<mosaic_0001>
module attributes {stable_mosaic.version = 11 : i64} {
  func.func @_linear_kernel(%arg0: i32, %arg1: memref<162x9xf32, #tpu.memory_space<vmem>>, %arg2: memref<9x32xf32, #tpu.memory_space<vmem>>, %arg3: memref<1x32xf32, #tpu.memory_space<vmem>>, %arg4: memref<162x32xf32, #tpu.memory_space<vmem>>) attributes {dimension_semantics = [#tpu.dimension_semantics<parallel>], iteration_bounds = array<i64: 1>, scalar_prefetch = 0 : i64, scratch_operands = 0 : i64, tpu.core_type = #tpu.core_type<tc>, window_params = [{transform_indices = @transform_0, window_bounds = array<i64: 162, 9>}, {pipeline_mode = #tpu.pipeline_mode<synchronous>, transform_indices = @transform_1, window_bounds = array<i64: 9, 32>}, {pipeline_mode = #tpu.pipeline_mode<synchronous>, transform_indices = @transform_2, window_bounds = array<i64: 1, 32>}, {transform_indices = @transform_3, window_bounds = array<i64: 162, 32>}]} {
    %c0 = arith.constant 0 : index
    %c0_0 = arith.constant 0 : index
    %0 = vector.load %arg1[%c0, %c0_0] : memref<162x9xf32, #tpu.memory_space<vmem>>, vector<162x9xf32>
    %c0_1 = arith.constant 0 : index
    %c0_2 = arith.constant 0 : index
    %1 = vector.load %arg2[%c0_1, %c0_2] : memref<9x32xf32, #tpu.memory_space<vmem>>, vector<9x32xf32>
    %cst = arith.constant dense<0.000000e+00> : vector<162x32xf32>
    %2 = tpu.matmul %0, %1, %cst {dimension_numbers = #tpu.dot_dimension_numbers<[1], [0], [0], [1], [0, 0, 1, 1], [], []>} : vector<162x9xf32>, vector<9x32xf32>, vector<162x32xf32> -> vector<162x32xf32>
    %c0_3 = arith.constant 0 : index
    %c0_4 = arith.constant 0 : index
    %3 = vector.load %arg3[%c0_3, %c0_4] : memref<1x32xf32, #tpu.memory_space<vmem>>, vector<1x32xf32>
    %4 = vector.broadcast %3 : vector<1x32xf32> to vector<162x32xf32>
    %5 = arith.addf %2, %4 : vector<162x32xf32>
    %cst_5 = arith.constant 0.000000e+00 : f32
    %6 = vector.broadcast %cst_5 : f32 to vector<162x32xf32>
    %7 = arith.maximumf %5, %6 : vector<162x32xf32>
    %c0_6 = arith.constant 0 : index
    %c0_7 = arith.constant 0 : index
    %8 = vector.load %arg4[%c0_6, %c0_7] : memref<162x32xf32, #tpu.memory_space<vmem>>, vector<162x32xf32>
    tpu.vector_store %arg4[%c0_6, %c0_7], %7 {strides = array<i32>} : memref<162x32xf32, #tpu.memory_space<vmem>>, vector<162x32xf32>,
    return
  }
  func.func @transform_0(%arg0: i32) -> (i32, i32) {
    %c0_i32 = arith.constant 0 : i32
    %c0_i32_0 = arith.constant 0 : i32
    return %arg0, %c0_i32 : i32, i32
  }
  func.func @transform_1(%arg0: i32) -> (i32, i32) {
    %c0_i32 = arith.constant 0 : i32
    %c0_i32_0 = arith.constant 0 : i32
    %c0_i32_1 = arith.constant 0 : i32
    return %c0_i32, %c0_i32_0 : i32, i32
  }
  func.func @transform_2(%arg0: i32) -> (i32, i32) {
    %c0_i32 = arith.constant 0 : i32
    %c0_i32_0 = arith.constant 0 : i32
    %c0_i32_1 = arith.constant 0 : i32
    return %c0_i32, %c0_i32_0 : i32, i32
  }
  func.func @transform_3(%arg0: i32) -> (i32, i32) {
    %c0_i32 = arith.constant 0 : i32
    %c0_i32_0 = arith.constant 0 : i32
    return %arg0, %c0_i32 : i32, i32
  }
}

module attributes {stable_mosaic.version = 11 : i64} {
  func.func @_linear_kernel(%arg0: i32, %arg1: memref<32x288xf32, #tpu.memory_space<vmem>>, %arg2: memref<288x32xf32, #tpu.memory_space<vmem>>, %arg3: memref<1x32xf32, #tpu.memory_space<vmem>>, %arg4: memref<32x32xf32, #tpu.memory_space<vmem>>) attributes {dimension_semantics = [#tpu.dimension_semantics<parallel>], iteration_bounds = array<i64: 1>, scalar_prefetch = 0 : i64, scratch_operands = 0 : i64, tpu.core_type = #tpu.core_type<tc>, window_params = [{transform_indices = @transform_0, window_bounds = array<i64: 32, 288>}, {pipeline_mode = #tpu.pipeline_mode<synchronous>, transform_indices = @transform_1, window_bounds = array<i64: 288, 32>}, {pipeline_mode = #tpu.pipeline_mode<synchronous>, transform_indices = @transform_2, window_bounds = array<i64: 1, 32>}, {transform_indices = @transform_3, window_bounds = array<i64: 32, 32>}]} {
    %c0 = arith.constant 0 : index
    %c0_0 = arith.constant 0 : index
    %0 = vector.load %arg1[%c0, %c0_0] : memref<32x288xf32, #tpu.memory_space<vmem>>, vector<32x288xf32>
    %c0_1 = arith.constant 0 : index
    %c0_2 = arith.constant 0 : index
    %1 = vector.load %arg2[%c0_1, %c0_2] : memref<288x32xf32, #tpu.memory_space<vmem>>, vector<288x32xf32>
    %cst = arith.constant dense<0.000000e+00> : vector<32x32xf32>
    %2 = tpu.matmul %0, %1, %cst {dimension_numbers = #tpu.dot_dimension_numbers<[1], [0], [0], [1], [0, 0, 1, 1], [], []>} : vector<32x288xf32>, vector<288x32xf32>, vector<32x32xf32> -> vector<32x32xf32>
    %c0_3 = arith.constant 0 : index
    %c0_4 = arith.constant 0 : index
    %3 = vector.load %arg3[%c0_3, %c0_4] : memref<1x32xf32, #tpu.memory_space<vmem>>, vector<1x32xf32>
    %4 = vector.broadcast %3 : vector<1x32xf32> to vector<32x32xf32>
    %5 = arith.addf %2, %4 : vector<32x32xf32>
    %cst_5 = arith.constant 0.000000e+00 : f32
    %6 = vector.broadcast %cst_5 : f32 to vector<32x32xf32>
    %7 = arith.maximumf %5, %6 : vector<32x32xf32>
    %c0_6 = arith.constant 0 : index
    %c0_7 = arith.constant 0 : index
    %8 = vector.load %arg4[%c0_6, %c0_7] : memref<32x32xf32, #tpu.memory_space<vmem>>, vector<32x32xf32>
    tpu.vector_store %arg4[%c0_6, %c0_7], %7 {strides = array<i32>} : memref<32x32xf32, #tpu.memory_space<vmem>>, vector<32x32xf32>,
    return
  }
  func.func @transform_0(%arg0: i32) -> (i32, i32) {
    %c0_i32 = arith.constant 0 : i32
    %c0_i32_0 = arith.constant 0 : i32
    return %arg0, %c0_i32 : i32, i32
  }
  func.func @transform_1(%arg0: i32) -> (i32, i32) {
    %c0_i32 = arith.constant 0 : i32
    %c0_i32_0 = arith.constant 0 : i32
    %c0_i32_1 = arith.constant 0 : i32
    return %c0_i32, %c0_i32_0 : i32, i32
  }
  func.func @transform_2(%arg0: i32) -> (i32, i32) {
    %c0_i32 = arith.constant 0 : i32
    %c0_i32_0 = arith.constant 0 : i32
    %c0_i32_1 = arith.constant 0 : i32
    return %c0_i32, %c0_i32_0 : i32, i32
  }
  func.func @transform_3(%arg0: i32) -> (i32, i32) {
    %c0_i32 = arith.constant 0 : i32
    %c0_i32_0 = arith.constant 0 : i32
    return %arg0, %c0_i32 : i32, i32
  }
}

module attributes {stable_mosaic.version = 11 : i64} {
  func.func @_linear_kernel(%arg0: i32, %arg1: memref<8x128xf32, #tpu.memory_space<vmem>>, %arg2: memref<128x32xf32, #tpu.memory_space<vmem>>, %arg3: memref<1x32xf32, #tpu.memory_space<vmem>>, %arg4: memref<8x32xf32, #tpu.memory_space<vmem>>) attributes {dimension_semantics = [#tpu.dimension_semantics<parallel>], iteration_bounds = array<i64: 1>, scalar_prefetch = 0 : i64, scratch_operands = 0 : i64, tpu.core_type = #tpu.core_type<tc>, window_params = [{transform_indices = @transform_0, window_bounds = array<i64: 8, 128>}, {pipeline_mode = #tpu.pipeline_mode<synchronous>, transform_indices = @transform_1, window_bounds = array<i64: 128, 32>}, {pipeline_mode = #tpu.pipeline_mode<synchronous>, transform_indices = @transform_2, window_bounds = array<i64: 1, 32>}, {transform_indices = @transform_3, window_bounds = array<i64: 8, 32>}]} {
    %c0 = arith.constant 0 : index
    %c0_0 = arith.constant 0 : index
    %0 = vector.load %arg1[%c0, %c0_0] : memref<8x128xf32, #tpu.memory_space<vmem>>, vector<8x128xf32>
    %c0_1 = arith.constant 0 : index
    %c0_2 = arith.constant 0 : index
    %1 = vector.load %arg2[%c0_1, %c0_2] : memref<128x32xf32, #tpu.memory_space<vmem>>, vector<128x32xf32>
    %cst = arith.constant dense<0.000000e+00> : vector<8x32xf32>
    %2 = tpu.matmul %0, %1, %cst {dimension_numbers = #tpu.dot_dimension_numbers<[1], [0], [0], [1], [0, 0, 1, 1], [], []>} : vector<8x128xf32>, vector<128x32xf32>, vector<8x32xf32> -> vector<8x32xf32>
    %c0_3 = arith.constant 0 : index
    %c0_4 = arith.constant 0 : index
    %3 = vector.load %arg3[%c0_3, %c0_4] : memref<1x32xf32, #tpu.memory_space<vmem>>, vector<1x32xf32>
    %4 = vector.broadcast %3 : vector<1x32xf32> to vector<8x32xf32>
    %5 = arith.addf %2, %4 : vector<8x32xf32>
    %c0_5 = arith.constant 0 : index
    %c0_6 = arith.constant 0 : index
    %6 = vector.load %arg4[%c0_5, %c0_6] : memref<8x32xf32, #tpu.memory_space<vmem>>, vector<8x32xf32>
    tpu.vector_store %arg4[%c0_5, %c0_6], %5 {strides = array<i32>} : memref<8x32xf32, #tpu.memory_space<vmem>>, vector<8x32xf32>,
    return
  }
  func.func @transform_0(%arg0: i32) -> (i32, i32) {
    %c0_i32 = arith.constant 0 : i32
    %c0_i32_0 = arith.constant 0 : i32
    return %arg0, %c0_i32 : i32, i32
  }
  func.func @transform_1(%arg0: i32) -> (i32, i32) {
    %c0_i32 = arith.constant 0 : i32
    %c0_i32_0 = arith.constant 0 : i32
    %c0_i32_1 = arith.constant 0 : i32
    return %c0_i32, %c0_i32_0 : i32, i32
  }
  func.func @transform_2(%arg0: i32) -> (i32, i32) {
    %c0_i32 = arith.constant 0 : i32
    %c0_i32_0 = arith.constant 0 : i32
    %c0_i32_1 = arith.constant 0 : i32
    return %c0_i32, %c0_i32_0 : i32, i32
  }
  func.func @transform_3(%arg0: i32) -> (i32, i32) {
    %c0_i32 = arith.constant 0 : i32
    %c0_i32_0 = arith.constant 0 : i32
    return %arg0, %c0_i32 : i32, i32
  }
}

module attributes {stable_mosaic.version = 11 : i64} {
  func.func @_final_loss_kernel(%arg0: i32, %arg1: memref<8x32xf32, #tpu.memory_space<vmem>>, %arg2: memref<8x1xi32, #tpu.memory_space<vmem>>, %arg3: memref<1x32xf32, #tpu.memory_space<vmem>>, %arg4: memref<1x32xf32, #tpu.memory_space<vmem>>, %arg5: memref<32x8xf32, #tpu.memory_space<vmem>>, %arg6: memref<1x8xf32, #tpu.memory_space<vmem>>, %arg7: memref<1x1xf32, #tpu.memory_space<vmem>>, %arg8: memref<1x1xf32, #tpu.memory_space<vmem>>, %arg9: memref<1x1xf32, #tpu.memory_space<vmem>>) attributes {dimension_semantics = [#tpu.dimension_semantics<arbitrary>], iteration_bounds = array<i64: 1>, scalar_prefetch = 0 : i64, scratch_operands = 2 : i64, tpu.core_type = #tpu.core_type<tc>, window_params = [{transform_indices = @transform_0, window_bounds = array<i64: 8, 32>}, {transform_indices = @transform_1, window_bounds = array<i64: 8, 1>}, {pipeline_mode = #tpu.pipeline_mode<synchronous>, transform_indices = @transform_2, window_bounds = array<i64: 1, 32>}, {pipeline_mode = #tpu.pipeline_mode<synchronous>, transform_indices = @transform_3, window_bounds = array<i64: 1, 32>}, {pipeline_mode = #tpu.pipeline_mode<synchronous>, transform_indices = @transform_4, window_bounds = array<i64: 32, 8>}, {pipeline_mode = #tpu.pipeline_mode<synchronous>, transform_indices = @transform_5, window_bounds = array<i64: 1, 8>}, {pipeline_mode = #tpu.pipeline_mode<synchronous>, transform_indices = @transform_6, window_bounds = array<i64: 1, 1>}]} {
    %c0_i32 = arith.constant 0 : i32
    %0 = arith.cmpi eq, %arg0, %c0_i32 : i32
    %1 = arith.extui %0 : i1 to i32
    %c0_i32_0 = arith.constant 0 : i32
    %2 = arith.cmpi ne, %1, %c0_i32_0 : i32
    scf.if %2 {
      %cst_40 = arith.constant 0.000000e+00 : f32
      %87 = vector.broadcast %cst_40 : f32 to vector<1x1xf32>
      %c0_41 = arith.constant 0 : index
      %c0_42 = arith.constant 0 : index
      %88 = vector.load %arg8[%c0_41, %c0_42] : memref<1x1xf32, #tpu.memory_space<vmem>>, vector<1x1xf32>
      tpu.vector_store %arg8[%c0_41, %c0_42], %87 {strides = array<i32>} : memref<1x1xf32, #tpu.memory_space<vmem>>, vector<1x1xf32>,
      %cst_43 = arith.constant 0.000000e+00 : f32
      %89 = vector.broadcast %cst_43 : f32 to vector<1x1xf32>
      %c0_44 = arith.constant 0 : index
      %c0_45 = arith.constant 0 : index
      %90 = vector.load %arg9[%c0_44, %c0_45] : memref<1x1xf32, #tpu.memory_space<vmem>>, vector<1x1xf32>
      tpu.vector_store %arg9[%c0_44, %c0_45], %89 {strides = array<i32>} : memref<1x1xf32, #tpu.memory_space<vmem>>, vector<1x1xf32>,
    } else {
    }
    %c0 = arith.constant 0 : index
    %c0_1 = arith.constant 0 : index
    %3 = vector.load %arg1[%c0, %c0_1] : memref<8x32xf32, #tpu.memory_space<vmem>>, vector<8x32xf32>
    %c0_2 = arith.constant 0 : index
    %c0_3 = arith.constant 0 : index
    %4 = vector.load %arg2[%c0_2, %c0_3] : memref<8x1xi32, #tpu.memory_space<vmem>>, vector<8x1xi32>
    %c0_4 = arith.constant 0 : index
    %c0_5 = arith.constant 0 : index
    %5 = vector.load %arg3[%c0_4, %c0_5] : memref<1x32xf32, #tpu.memory_space<vmem>>, vector<1x32xf32>
    %c0_6 = arith.constant 0 : index
    %c0_7 = arith.constant 0 : index
    %6 = vector.load %arg4[%c0_6, %c0_7] : memref<1x32xf32, #tpu.memory_space<vmem>>, vector<1x32xf32>
    %cst = arith.constant dense<0.000000e+00> : vector<8xf32>
    %7 = vector.multi_reduction <add>, %3, %cst [1] : vector<8x32xf32> to vector<8xf32>
    %8 = vector.shape_cast %7 : vector<8xf32> to vector<8x1xf32>
    %cst_8 = arith.constant 3.200000e+01 : f32
    %9 = vector.broadcast %cst_8 : f32 to vector<8x1xf32>
    %10 = arith.divf %8, %9 : vector<8x1xf32>
    %11 = vector.broadcast %10 : vector<8x1xf32> to vector<8x32xf32>
    %12 = arith.subf %3, %11 : vector<8x32xf32>
    %13 = arith.mulf %12, %12 : vector<8x32xf32>
    %cst_9 = arith.constant dense<0.000000e+00> : vector<8xf32>
    %14 = vector.multi_reduction <add>, %13, %cst_9 [1] : vector<8x32xf32> to vector<8xf32>
    %15 = vector.shape_cast %14 : vector<8xf32> to vector<8x1xf32>
    %cst_10 = arith.constant 3.200000e+01 : f32
    %16 = vector.broadcast %cst_10 : f32 to vector<8x1xf32>
    %17 = arith.divf %15, %16 : vector<8x1xf32>
    %18 = vector.broadcast %10 : vector<8x1xf32> to vector<8x32xf32>
    %19 = arith.subf %3, %18 : vector<8x32xf32>
    %cst_11 = arith.constant 9.99999996E-13 : f32
    %20 = vector.broadcast %cst_11 : f32 to vector<8x1xf32>
    %21 = arith.addf %17, %20 : vector<8x1xf32>
    %22 = math.rsqrt %21 : vector<8x1xf32>
    %23 = vector.broadcast %22 : vector<8x1xf32> to vector<8x32xf32>
    %24 = arith.mulf %19, %23 : vector<8x32xf32>
    %25 = vector.broadcast %5 : vector<1x32xf32> to vector<8x32xf32>
    %26 = arith.mulf %24, %25 : vector<8x32xf32>
    %27 = vector.broadcast %6 : vector<1x32xf32> to vector<8x32xf32>
    %28 = arith.addf %26, %27 : vector<8x32xf32>
    %c0_12 = arith.constant 0 : index
    %c0_13 = arith.constant 0 : index
    %29 = vector.load %arg5[%c0_12, %c0_13] : memref<32x8xf32, #tpu.memory_space<vmem>>, vector<32x8xf32>
    %cst_14 = arith.constant dense<0.000000e+00> : vector<8x8xf32>
    %30 = tpu.matmul %28, %29, %cst_14 {dimension_numbers = #tpu.dot_dimension_numbers<[1], [0], [0], [1], [0, 0, 1, 1], [], []>} : vector<8x32xf32>, vector<32x8xf32>, vector<8x8xf32> -> vector<8x8xf32>
    %c0_15 = arith.constant 0 : index
    %c0_16 = arith.constant 0 : index
    %31 = vector.load %arg6[%c0_15, %c0_16] : memref<1x8xf32, #tpu.memory_space<vmem>>, vector<1x8xf32>
    %32 = vector.broadcast %31 : vector<1x8xf32> to vector<8x8xf32>
    %33 = arith.addf %30, %32 : vector<8x8xf32>
    %cst_17 = arith.constant dense<0xFF800000> : vector<8xf32>
    %34 = vector.multi_reduction <maximumf>, %33, %cst_17 [1] : vector<8x8xf32> to vector<8xf32>
    %35 = vector.shape_cast %34 : vector<8xf32> to vector<8x1xf32>
    %36 = vector.broadcast %35 : vector<8x1xf32> to vector<8x8xf32>
    %37 = arith.subf %33, %36 : vector<8x8xf32>
    %38 = math.exp %37 : vector<8x8xf32>
    %cst_18 = arith.constant dense<0.000000e+00> : vector<8xf32>
    %39 = vector.multi_reduction <add>, %38, %cst_18 [1] : vector<8x8xf32> to vector<8xf32>
    %40 = vector.shape_cast %39 : vector<8xf32> to vector<8x1xf32>
    %41 = math.log %40 : vector<8x1xf32>
    %42 = vector.broadcast %41 : vector<8x1xf32> to vector<8x8xf32>
    %43 = arith.subf %37, %42 : vector<8x8xf32>
    %c-1_i32 = arith.constant -1 : i32
    %44 = vector.broadcast %c-1_i32 : i32 to vector<8x1xi32>
    %45 = arith.cmpi eq, %4, %44 : vector<8x1xi32>
    %c0_i32_19 = arith.constant 0 : i32
    %46 = vector.broadcast %c0_i32_19 : i32 to vector<8x1xi32>
    %47 = arith.select %45, %46, %4 : vector<8x1xi1>, vector<8x1xi32>
    %48 = tpu.iota {dimensions = array<i32: 1>} : vector<8x8xi32>
    %49 = vector.broadcast %47 : vector<8x1xi32> to vector<8x8xi32>
    %50 = arith.cmpi eq, %48, %49 : vector<8x8xi32>
    %cst_20 = arith.constant 0.000000e+00 : f32
    %51 = vector.broadcast %cst_20 : f32 to vector<8x8xf32>
    %52 = arith.select %50, %43, %51 : vector<8x8xi1>, vector<8x8xf32>
    %cst_21 = arith.constant dense<0.000000e+00> : vector<8xf32>
    %53 = vector.multi_reduction <add>, %52, %cst_21 [1] : vector<8x8xf32> to vector<8xf32>
    %54 = vector.shape_cast %53 : vector<8xf32> to vector<8x1xf32>
    %cst_22 = arith.constant dense<0.000000e+00> : vector<8xf32>
    %55 = vector.multi_reduction <add>, %43, %cst_22 [1] : vector<8x8xf32> to vector<8xf32>
    %56 = vector.shape_cast %55 : vector<8xf32> to vector<8x1xf32>
    %cst_23 = arith.constant 0.0142857144 : f32
    %57 = vector.broadcast %cst_23 : f32 to vector<8x1xf32>
    %58 = arith.mulf %57, %56 : vector<8x1xf32>
    %cst_24 = arith.constant 0.885714293 : f32
    %59 = vector.broadcast %cst_24 : f32 to vector<8x1xf32>
    %60 = arith.mulf %59, %54 : vector<8x1xf32>
    %61 = arith.addf %58, %60 : vector<8x1xf32>
    %cst_25 = arith.constant 0.000000e+00 : f32
    %cst_26 = arith.constant 1.000000e+00 : f32
    %62 = vector.broadcast %cst_25 : f32 to vector<8x1xf32>
    %63 = vector.broadcast %cst_26 : f32 to vector<8x1xf32>
    %64 = arith.select %45, %62, %63 : vector<8x1xi1>, vector<8x1xf32>
    %c0_27 = arith.constant 0 : index
    %c0_28 = arith.constant 0 : index
    %65 = vector.load %arg8[%c0_27, %c0_28] : memref<1x1xf32, #tpu.memory_space<vmem>>, vector<1x1xf32>
    %cst_29 = arith.constant -5.196740e-01 : f32
    %66 = vector.broadcast %cst_29 : f32 to vector<8x1xf32>
    %67 = arith.subf %66, %61 : vector<8x1xf32>
    %68 = arith.mulf %67, %64 : vector<8x1xf32>
    %69 = vector.shape_cast %68 : vector<8x1xf32> to vector<1x8x1xf32>
    %cst_30 = arith.constant dense<0.000000e+00> : vector<1xf32>
    %70 = vector.multi_reduction <add>, %69, %cst_30 [1, 2] : vector<1x8x1xf32> to vector<1xf32>
    %71 = vector.shape_cast %70 : vector<1xf32> to vector<1x1x1xf32>
    %72 = vector.extract %71[0, 0, 0] : f32 from vector<1x1x1xf32>
    %73 = vector.broadcast %72 : f32 to vector<1x1xf32>
    %74 = arith.addf %65, %73 : vector<1x1xf32>
    %c0_31 = arith.constant 0 : index
    %c0_32 = arith.constant 0 : index
    %75 = vector.load %arg8[%c0_31, %c0_32] : memref<1x1xf32, #tpu.memory_space<vmem>>, vector<1x1xf32>
    tpu.vector_store %arg8[%c0_31, %c0_32], %74 {strides = array<i32>} : memref<1x1xf32, #tpu.memory_space<vmem>>, vector<1x1xf32>,
    %c0_33 = arith.constant 0 : index
    %c0_34 = arith.constant 0 : index
    %76 = vector.load %arg9[%c0_33, %c0_34] : memref<1x1xf32, #tpu.memory_space<vmem>>, vector<1x1xf32>
    %77 = vector.shape_cast %64 : vector<8x1xf32> to vector<1x8x1xf32>
    %cst_35 = arith.constant dense<0.000000e+00> : vector<1xf32>
    %78 = vector.multi_reduction <add>, %77, %cst_35 [1, 2] : vector<1x8x1xf32> to vector<1xf32>
    %79 = vector.shape_cast %78 : vector<1xf32> to vector<1x1x1xf32>
    %80 = vector.extract %79[0, 0, 0] : f32 from vector<1x1x1xf32>
    %81 = vector.broadcast %80 : f32 to vector<1x1xf32>
    %82 = arith.addf %76, %81 : vector<1x1xf32>
    %c0_36 = arith.constant 0 : index
    %c0_37 = arith.constant 0 : index
    %83 = vector.load %arg9[%c0_36, %c0_37] : memref<1x1xf32, #tpu.memory_space<vmem>>, vector<1x1xf32>
    tpu.vector_store %arg9[%c0_36, %c0_37], %82 {strides = array<i32>} : memref<1x1xf32, #tpu.memory_space<vmem>>, vector<1x1xf32>,
    %c0_i32_38 = arith.constant 0 : i32
    %84 = arith.cmpi eq, %arg0, %c0_i32_38 : i32
    %85 = arith.extui %84 : i1 to i32
    %c0_i32_39 = arith.constant 0 : i32
    %86 = arith.cmpi ne, %85, %c0_i32_39 : i32
    scf.if %86 {
      %c0_40 = arith.constant 0 : index
      %c0_41 = arith.constant 0 : index
      %87 = vector.load %arg9[%c0_40, %c0_41] : memref<1x1xf32, #tpu.memory_space<vmem>>, vector<1x1xf32>
      %cst_42 = arith.constant 1.000000e+00 : f32
      %88 = vector.broadcast %cst_42 : f32 to vector<1x1xf32>
      %89 = arith.maximumf %87, %88 : vector<1x1xf32>
      %c0_43 = arith.constant 0 : index
      %c0_44 = arith.constant 0 : index
      %90 = vector.load %arg8[%c0_43, %c0_44] : memref<1x1xf32, #tpu.memory_space<vmem>>, vector<1x1xf32>
      %91 = arith.divf %90, %89 : vector<1x1xf32>
      %c0_45 = arith.constant 0 : index
      %c0_46 = arith.constant 0 : index
      %92 = vector.load %arg7[%c0_45, %c0_46] : memref<1x1xf32, #tpu.memory_space<vmem>>, vector<1x1xf32>
      tpu.vector_store %arg7[%c0_45, %c0_46], %91 {strides = array<i32>} : memref<1x1xf32, #tpu.memory_space<vmem>>, vector<1x1xf32>,
    } else {
    }
    return
  }
  func.func @transform_0(%arg0: i32) -> (i32, i32) {
    %c0_i32 = arith.constant 0 : i32
    %c0_i32_0 = arith.constant 0 : i32
    return %arg0, %c0_i32 : i32, i32
  }
  func.func @transform_1(%arg0: i32) -> (i32, i32) {
    %c0_i32 = arith.constant 0 : i32
    %c0_i32_0 = arith.constant 0 : i32
    return %arg0, %c0_i32 : i32, i32
  }
  func.func @transform_2(%arg0: i32) -> (i32, i32) {
    %c0_i32 = arith.constant 0 : i32
    %c0_i32_0 = arith.constant 0 : i32
    %c0_i32_1 = arith.constant 0 : i32
    return %c0_i32, %c0_i32_0 : i32, i32
  }
  func.func @transform_3(%arg0: i32) -> (i32, i32) {
    %c0_i32 = arith.constant 0 : i32
    %c0_i32_0 = arith.constant 0 : i32
    %c0_i32_1 = arith.constant 0 : i32
    return %c0_i32, %c0_i32_0 : i32, i32
  }
  func.func @transform_4(%arg0: i32) -> (i32, i32) {
    %c0_i32 = arith.constant 0 : i32
    %c0_i32_0 = arith.constant 0 : i32
    %c0_i32_1 = arith.constant 0 : i32
    return %c0_i32, %c0_i32_0 : i32, i32
  }
  func.func @transform_5(%arg0: i32) -> (i32, i32) {
    %c0_i32 = arith.constant 0 : i32
    %c0_i32_0 = arith.constant 0 : i32
    %c0_i32_1 = arith.constant 0 : i32
    return %c0_i32, %c0_i32_0 : i32, i32
  }
  func.func @transform_6(%arg0: i32) -> (i32, i32) {
    %c0_i32 = arith.constant 0 : i32
    %c0_i32_0 = arith.constant 0 : i32
    %c0_i32_1 = arith.constant 0 : i32
    return %c0_i32, %c0_i32_0 : i32, i32
  }
}

module attributes {stable_mosaic.version = 11 : i64} {
  func.func @_encoder_layer_kernel(%arg0: i32, %arg1: memref<1x4x32xf32, #tpu.memory_space<vmem>>, %arg2: memref<1x1x4xf32, #tpu.memory_space<vmem>>, %arg3: memref<1x32xf32, #tpu.memory_space<vmem>>, %arg4: memref<1x32xf32, #tpu.memory_space<vmem>>, %arg5: memref<32x96xf32, #tpu.memory_space<vmem>>, %arg6: memref<1x96xf32, #tpu.memory_space<vmem>>, %arg7: memref<32x32xf32, #tpu.memory_space<vmem>>, %arg8: memref<1x32xf32, #tpu.memory_space<vmem>>, %arg9: memref<1x32xf32, #tpu.memory_space<vmem>>, %arg10: memref<1x32xf32, #tpu.memory_space<vmem>>, %arg11: memref<32x48xf32, #tpu.memory_space<vmem>>, %arg12: memref<1x48xf32, #tpu.memory_space<vmem>>, %arg13: memref<48x32xf32, #tpu.memory_space<vmem>>, %arg14: memref<1x32xf32, #tpu.memory_space<vmem>>, %arg15: memref<1x4x32xf32, #tpu.memory_space<vmem>>) attributes {dimension_semantics = [#tpu.dimension_semantics<parallel>], iteration_bounds = array<i64: 2>, scalar_prefetch = 0 : i64, scratch_operands = 0 : i64, tpu.core_type = #tpu.core_type<tc>, window_params = [{transform_indices = @transform_0, window_bounds = array<i64: 1, 4, 32>}, {transform_indices = @transform_1, window_bounds = array<i64: 1, 1, 4>}, {pipeline_mode = #tpu.pipeline_mode<synchronous>, transform_indices = @transform_2, window_bounds = array<i64: 1, 32>}, {pipeline_mode = #tpu.pipeline_mode<synchronous>, transform_indices = @transform_3, window_bounds = array<i64: 1, 32>}, {pipeline_mode = #tpu.pipeline_mode<synchronous>, transform_indices = @transform_4, window_bounds = array<i64: 32, 96>}, {pipeline_mode = #tpu.pipeline_mode<synchronous>, transform_indices = @transform_5, window_bounds = array<i64: 1, 96>}, {pipeline_mode = #tpu.pipeline_mode<synchronous>, transform_indices = @transform_6, window_bounds = array<i64: 32, 32>}, {pipeline_mode = #tpu.pipeline_mode<synchronous>, transform_indices = @transform_7, window_bounds = array<i64: 1, 32>}, {pipeline_mode = #tpu.pipeline_mode<synchronous>, transform_indices = @transform_8, window_bounds = array<i64: 1, 32>}, {pipeline_mode = #tpu.pipeline_mode<synchronous>, transform_indices = @transform_9, window_bounds = array<i64: 1, 32>}, {pipeline_mode = #tpu.pipeline_mode<synchronous>, transform_indices = @transform_10, window_bounds = array<i64: 32, 48>}, {pipeline_mode = #tpu.pipeline_mode<synchronous>, transform_indices = @transform_11, window_bounds = array<i64: 1, 48>}, {pipeline_mode = #tpu.pipeline_mode<synchronous>, transform_indices = @transform_12, window_bounds = array<i64: 48, 32>}, {pipeline_mode = #tpu.pipeline_mode<synchronous>, transform_indices = @transform_13, window_bounds = array<i64: 1, 32>}, {transform_indices = @transform_14, window_bounds = array<i64: 1, 4, 32>}]} {
    %c0 = arith.constant 0 : index
    %c0_0 = arith.constant 0 : index
    %c0_1 = arith.constant 0 : index
    %0 = vector.load %arg1[%c0, %c0_0, %c0_1] : memref<1x4x32xf32, #tpu.memory_space<vmem>>, vector<1x4x32xf32>
    %1 = vector.shape_cast %0 : vector<1x4x32xf32> to vector<4x32xf32>
    %c0_2 = arith.constant 0 : index
    %c0_3 = arith.constant 0 : index
    %c0_4 = arith.constant 0 : index
    %2 = vector.load %arg2[%c0_2, %c0_3, %c0_4] : memref<1x1x4xf32, #tpu.memory_space<vmem>>, vector<1x1x4xf32>
    %3 = vector.shape_cast %2 : vector<1x1x4xf32> to vector<1x4xf32>
    %c0_5 = arith.constant 0 : index
    %c0_6 = arith.constant 0 : index
    %4 = vector.load %arg3[%c0_5, %c0_6] : memref<1x32xf32, #tpu.memory_space<vmem>>, vector<1x32xf32>
    %c0_7 = arith.constant 0 : index
    %c0_8 = arith.constant 0 : index
    %5 = vector.load %arg4[%c0_7, %c0_8] : memref<1x32xf32, #tpu.memory_space<vmem>>, vector<1x32xf32>
    %cst = arith.constant dense<0.000000e+00> : vector<4xf32>
    %6 = vector.multi_reduction <add>, %1, %cst [1] : vector<4x32xf32> to vector<4xf32>
    %7 = vector.shape_cast %6 : vector<4xf32> to vector<4x1xf32>
    %cst_9 = arith.constant 3.200000e+01 : f32
    %8 = vector.broadcast %cst_9 : f32 to vector<4x1xf32>
    %9 = arith.divf %7, %8 : vector<4x1xf32>
    %10 = vector.broadcast %9 : vector<4x1xf32> to vector<4x32xf32>
    %11 = arith.subf %1, %10 : vector<4x32xf32>
    %12 = arith.mulf %11, %11 : vector<4x32xf32>
    %cst_10 = arith.constant dense<0.000000e+00> : vector<4xf32>
    %13 = vector.multi_reduction <add>, %12, %cst_10 [1] : vector<4x32xf32> to vector<4xf32>
    %14 = vector.shape_cast %13 : vector<4xf32> to vector<4x1xf32>
    %cst_11 = arith.constant 3.200000e+01 : f32
    %15 = vector.broadcast %cst_11 : f32 to vector<4x1xf32>
    %16 = arith.divf %14, %15 : vector<4x1xf32>
    %17 = vector.broadcast %9 : vector<4x1xf32> to vector<4x32xf32>
    %18 = arith.subf %1, %17 : vector<4x32xf32>
    %cst_12 = arith.constant 9.99999996E-13 : f32
    %19 = vector.broadcast %cst_12 : f32 to vector<4x1xf32>
    %20 = arith.addf %16, %19 : vector<4x1xf32>
    %21 = math.rsqrt %20 : vector<4x1xf32>
    %22 = vector.broadcast %21 : vector<4x1xf32> to vector<4x32xf32>
    %23 = arith.mulf %18, %22 : vector<4x32xf32>
    %24 = vector.broadcast %4 : vector<1x32xf32> to vector<4x32xf32>
    %25 = arith.mulf %23, %24 : vector<4x32xf32>
    %26 = vector.broadcast %5 : vector<1x32xf32> to vector<4x32xf32>
    %27 = arith.addf %25, %26 : vector<4x32xf32>
    %c0_13 = arith.constant 0 : index
    %c0_14 = arith.constant 0 : index
    %28 = vector.load %arg5[%c0_13, %c0_14] : memref<32x96xf32, #tpu.memory_space<vmem>>, vector<32x96xf32>
    %cst_15 = arith.constant dense<0.000000e+00> : vector<4x96xf32>
    %29 = tpu.matmul %27, %28, %cst_15 {dimension_numbers = #tpu.dot_dimension_numbers<[1], [0], [0], [1], [0, 0, 1, 1], [], []>} : vector<4x32xf32>, vector<32x96xf32>, vector<4x96xf32> -> vector<4x96xf32>
    %c0_16 = arith.constant 0 : index
    %c0_17 = arith.constant 0 : index
    %30 = vector.load %arg6[%c0_16, %c0_17] : memref<1x96xf32, #tpu.memory_space<vmem>>, vector<1x96xf32>
    %31 = vector.broadcast %30 : vector<1x96xf32> to vector<4x96xf32>
    %32 = arith.addf %29, %31 : vector<4x96xf32>
    %cst_18 = arith.constant 1.000000e+00 : f32
    %33 = vector.broadcast %cst_18 : f32 to vector<1x4xf32>
    %34 = arith.subf %3, %33 : vector<1x4xf32>
    %cst_19 = arith.constant 1.000000e+30 : f32
    %35 = vector.broadcast %cst_19 : f32 to vector<1x4xf32>
    %36 = arith.mulf %34, %35 : vector<1x4xf32>
    %37 = vector.extract_strided_slice %32 {offsets = [0, 0], sizes = [4, 8], strides = [1, 1]} : vector<4x96xf32> to vector<4x8xf32>
    %cst_20 = arith.constant 0.353553385 : f32
    %38 = vector.broadcast %cst_20 : f32 to vector<4x8xf32>
    %39 = arith.mulf %37, %38 : vector<4x8xf32>
    %40 = vector.extract_strided_slice %32 {offsets = [0, 32], sizes = [4, 8], strides = [1, 1]} : vector<4x96xf32> to vector<4x8xf32>
    %41 = vector.extract_strided_slice %32 {offsets = [0, 64], sizes = [4, 8], strides = [1, 1]} : vector<4x96xf32> to vector<4x8xf32>
    %42 = tpu.transpose %40, [1, 0] : vector<4x8xf32> -> vector<8x4xf32>
    %cst_21 = arith.constant dense<0.000000e+00> : vector<4x4xf32>
    %43 = tpu.matmul %39, %42, %cst_21 {dimension_numbers = #tpu.dot_dimension_numbers<[1], [0], [0], [1], [0, 0, 1, 1], [], []>} : vector<4x8xf32>, vector<8x4xf32>, vector<4x4xf32> -> vector<4x4xf32>
    %44 = vector.broadcast %36 : vector<1x4xf32> to vector<4x4xf32>
    %45 = arith.addf %43, %44 : vector<4x4xf32>
    %cst_22 = arith.constant dense<0xFF800000> : vector<4xf32>
    %46 = vector.multi_reduction <maximumf>, %45, %cst_22 [1] : vector<4x4xf32> to vector<4xf32>
    %47 = vector.shape_cast %46 : vector<4xf32> to vector<4x1xf32>
    %48 = vector.broadcast %47 : vector<4x1xf32> to vector<4x4xf32>
    %49 = arith.subf %45, %48 : vector<4x4xf32>
    %50 = math.exp %49 : vector<4x4xf32>
    %cst_23 = arith.constant dense<0.000000e+00> : vector<4xf32>
    %51 = vector.multi_reduction <add>, %50, %cst_23 [1] : vector<4x4xf32> to vector<4xf32>
    %52 = vector.shape_cast %51 : vector<4xf32> to vector<4x1xf32>
    %53 = tpu.reciprocal %52 {approx = true} : vector<4x1xf32> -> vector<4x1xf32>
    %54 = vector.broadcast %53 : vector<4x1xf32> to vector<4x4xf32>
    %55 = arith.mulf %50, %54 : vector<4x4xf32>
    %56 = vector.broadcast %3 : vector<1x4xf32> to vector<4x4xf32>
    %57 = arith.mulf %55, %56 : vector<4x4xf32>
    %cst_24 = arith.constant dense<0.000000e+00> : vector<4x8xf32>
    %58 = tpu.matmul %57, %41, %cst_24 {dimension_numbers = #tpu.dot_dimension_numbers<[1], [0], [0], [1], [0, 0, 1, 1], [], []>} : vector<4x4xf32>, vector<4x8xf32>, vector<4x8xf32> -> vector<4x8xf32>
    %59 = vector.extract_strided_slice %32 {offsets = [0, 8], sizes = [4, 8], strides = [1, 1]} : vector<4x96xf32> to vector<4x8xf32>
    %cst_25 = arith.constant 0.353553385 : f32
    %60 = vector.broadcast %cst_25 : f32 to vector<4x8xf32>
    %61 = arith.mulf %59, %60 : vector<4x8xf32>
    %62 = vector.extract_strided_slice %32 {offsets = [0, 40], sizes = [4, 8], strides = [1, 1]} : vector<4x96xf32> to vector<4x8xf32>
    %63 = vector.extract_strided_slice %32 {offsets = [0, 72], sizes = [4, 8], strides = [1, 1]} : vector<4x96xf32> to vector<4x8xf32>
    %64 = tpu.transpose %62, [1, 0] : vector<4x8xf32> -> vector<8x4xf32>
    %cst_26 = arith.constant dense<0.000000e+00> : vector<4x4xf32>
    %65 = tpu.matmul %61, %64, %cst_26 {dimension_numbers = #tpu.dot_dimension_numbers<[1], [0], [0], [1], [0, 0, 1, 1], [], []>} : vector<4x8xf32>, vector<8x4xf32>, vector<4x4xf32> -> vector<4x4xf32>
    %66 = vector.broadcast %36 : vector<1x4xf32> to vector<4x4xf32>
    %67 = arith.addf %65, %66 : vector<4x4xf32>
    %cst_27 = arith.constant dense<0xFF800000> : vector<4xf32>
    %68 = vector.multi_reduction <maximumf>, %67, %cst_27 [1] : vector<4x4xf32> to vector<4xf32>
    %69 = vector.shape_cast %68 : vector<4xf32> to vector<4x1xf32>
    %70 = vector.broadcast %69 : vector<4x1xf32> to vector<4x4xf32>
    %71 = arith.subf %67, %70 : vector<4x4xf32>
    %72 = math.exp %71 : vector<4x4xf32>
    %cst_28 = arith.constant dense<0.000000e+00> : vector<4xf32>
    %73 = vector.multi_reduction <add>, %72, %cst_28 [1] : vector<4x4xf32> to vector<4xf32>
    %74 = vector.shape_cast %73 : vector<4xf32> to vector<4x1xf32>
    %75 = tpu.reciprocal %74 {approx = true} : vector<4x1xf32> -> vector<4x1xf32>
    %76 = vector.broadcast %75 : vector<4x1xf32> to vector<4x4xf32>
    %77 = arith.mulf %72, %76 : vector<4x4xf32>
    %78 = vector.broadcast %3 : vector<1x4xf32> to vector<4x4xf32>
    %79 = arith.mulf %77, %78 : vector<4x4xf32>
    %cst_29 = arith.constant dense<0.000000e+00> : vector<4x8xf32>
    %80 = tpu.matmul %79, %63, %cst_29 {dimension_numbers = #tpu.dot_dimension_numbers<[1], [0], [0], [1], [0, 0, 1, 1], [], []>} : vector<4x4xf32>, vector<4x8xf32>, vector<4x8xf32> -> vector<4x8xf32>
    %81 = vector.extract_strided_slice %32 {offsets = [0, 16], sizes = [4, 8], strides = [1, 1]} : vector<4x96xf32> to vector<4x8xf32>
    %cst_30 = arith.constant 0.353553385 : f32
    %82 = vector.broadcast %cst_30 : f32 to vector<4x8xf32>
    %83 = arith.mulf %81, %82 : vector<4x8xf32>
    %84 = vector.extract_strided_slice %32 {offsets = [0, 48], sizes = [4, 8], strides = [1, 1]} : vector<4x96xf32> to vector<4x8xf32>
    %85 = vector.extract_strided_slice %32 {offsets = [0, 80], sizes = [4, 8], strides = [1, 1]} : vector<4x96xf32> to vector<4x8xf32>
    %86 = tpu.transpose %84, [1, 0] : vector<4x8xf32> -> vector<8x4xf32>
    %cst_31 = arith.constant dense<0.000000e+00> : vector<4x4xf32>
    %87 = tpu.matmul %83, %86, %cst_31 {dimension_numbers = #tpu.dot_dimension_numbers<[1], [0], [0], [1], [0, 0, 1, 1], [], []>} : vector<4x8xf32>, vector<8x4xf32>, vector<4x4xf32> -> vector<4x4xf32>
    %88 = vector.broadcast %36 : vector<1x4xf32> to vector<4x4xf32>
    %89 = arith.addf %87, %88 : vector<4x4xf32>
    %cst_32 = arith.constant dense<0xFF800000> : vector<4xf32>
    %90 = vector.multi_reduction <maximumf>, %89, %cst_32 [1] : vector<4x4xf32> to vector<4xf32>
    %91 = vector.shape_cast %90 : vector<4xf32> to vector<4x1xf32>
    %92 = vector.broadcast %91 : vector<4x1xf32> to vector<4x4xf32>
    %93 = arith.subf %89, %92 : vector<4x4xf32>
    %94 = math.exp %93 : vector<4x4xf32>
    %cst_33 = arith.constant dense<0.000000e+00> : vector<4xf32>
    %95 = vector.multi_reduction <add>, %94, %cst_33 [1] : vector<4x4xf32> to vector<4xf32>
    %96 = vector.shape_cast %95 : vector<4xf32> to vector<4x1xf32>
    %97 = tpu.reciprocal %96 {approx = true} : vector<4x1xf32> -> vector<4x1xf32>
    %98 = vector.broadcast %97 : vector<4x1xf32> to vector<4x4xf32>
    %99 = arith.mulf %94, %98 : vector<4x4xf32>
    %100 = vector.broadcast %3 : vector<1x4xf32> to vector<4x4xf32>
    %101 = arith.mulf %99, %100 : vector<4x4xf32>
    %cst_34 = arith.constant dense<0.000000e+00> : vector<4x8xf32>
    %102 = tpu.matmul %101, %85, %cst_34 {dimension_numbers = #tpu.dot_dimension_numbers<[1], [0], [0], [1], [0, 0, 1, 1], [], []>} : vector<4x4xf32>, vector<4x8xf32>, vector<4x8xf32> -> vector<4x8xf32>
    %103 = vector.extract_strided_slice %32 {offsets = [0, 24], sizes = [4, 8], strides = [1, 1]} : vector<4x96xf32> to vector<4x8xf32>
    %cst_35 = arith.constant 0.353553385 : f32
    %104 = vector.broadcast %cst_35 : f32 to vector<4x8xf32>
    %105 = arith.mulf %103, %104 : vector<4x8xf32>
    %106 = vector.extract_strided_slice %32 {offsets = [0, 56], sizes = [4, 8], strides = [1, 1]} : vector<4x96xf32> to vector<4x8xf32>
    %107 = vector.extract_strided_slice %32 {offsets = [0, 88], sizes = [4, 8], strides = [1, 1]} : vector<4x96xf32> to vector<4x8xf32>
    %108 = tpu.transpose %106, [1, 0] : vector<4x8xf32> -> vector<8x4xf32>
    %cst_36 = arith.constant dense<0.000000e+00> : vector<4x4xf32>
    %109 = tpu.matmul %105, %108, %cst_36 {dimension_numbers = #tpu.dot_dimension_numbers<[1], [0], [0], [1], [0, 0, 1, 1], [], []>} : vector<4x8xf32>, vector<8x4xf32>, vector<4x4xf32> -> vector<4x4xf32>
    %110 = vector.broadcast %36 : vector<1x4xf32> to vector<4x4xf32>
    %111 = arith.addf %109, %110 : vector<4x4xf32>
    %cst_37 = arith.constant dense<0xFF800000> : vector<4xf32>
    %112 = vector.multi_reduction <maximumf>, %111, %cst_37 [1] : vector<4x4xf32> to vector<4xf32>
    %113 = vector.shape_cast %112 : vector<4xf32> to vector<4x1xf32>
    %114 = vector.broadcast %113 : vector<4x1xf32> to vector<4x4xf32>
    %115 = arith.subf %111, %114 : vector<4x4xf32>
    %116 = math.exp %115 : vector<4x4xf32>
    %cst_38 = arith.constant dense<0.000000e+00> : vector<4xf32>
    %117 = vector.multi_reduction <add>, %116, %cst_38 [1] : vector<4x4xf32> to vector<4xf32>
    %118 = vector.shape_cast %117 : vector<4xf32> to vector<4x1xf32>
    %119 = tpu.reciprocal %118 {approx = true} : vector<4x1xf32> -> vector<4x1xf32>
    %120 = vector.broadcast %119 : vector<4x1xf32> to vector<4x4xf32>
    %121 = arith.mulf %116, %120 : vector<4x4xf32>
    %122 = vector.broadcast %3 : vector<1x4xf32> to vector<4x4xf32>
    %123 = arith.mulf %121, %122 : vector<4x4xf32>
    %cst_39 = arith.constant dense<0.000000e+00> : vector<4x8xf32>
    %124 = tpu.matmul %123, %107, %cst_39 {dimension_numbers = #tpu.dot_dimension_numbers<[1], [0], [0], [1], [0, 0, 1, 1], [], []>} : vector<4x4xf32>, vector<4x8xf32>, vector<4x8xf32> -> vector<4x8xf32>
    %125 = tpu.concatenate %58, %80, %102, %124 in 1 : vector<4x8xf32>, vector<4x8xf32>, vector<4x8xf32>, vector<4x8xf32> -> vector<4x32xf32>
    %c0_40 = arith.constant 0 : index
    %c0_41 = arith.constant 0 : index
    %126 = vector.load %arg7[%c0_40, %c0_41] : memref<32x32xf32, #tpu.memory_space<vmem>>, vector<32x32xf32>
    %cst_42 = arith.constant dense<0.000000e+00> : vector<4x32xf32>
    %127 = tpu.matmul %125, %126, %cst_42 {dimension_numbers = #tpu.dot_dimension_numbers<[1], [0], [0], [1], [0, 0, 1, 1], [], []>} : vector<4x32xf32>, vector<32x32xf32>, vector<4x32xf32> -> vector<4x32xf32>
    %128 = arith.addf %1, %127 : vector<4x32xf32>
    %c0_43 = arith.constant 0 : index
    %c0_44 = arith.constant 0 : index
    %129 = vector.load %arg8[%c0_43, %c0_44] : memref<1x32xf32, #tpu.memory_space<vmem>>, vector<1x32xf32>
    %130 = vector.broadcast %129 : vector<1x32xf32> to vector<4x32xf32>
    %131 = arith.addf %128, %130 : vector<4x32xf32>
    %c0_45 = arith.constant 0 : index
    %c0_46 = arith.constant 0 : index
    %132 = vector.load %arg9[%c0_45, %c0_46] : memref<1x32xf32, #tpu.memory_space<vmem>>, vector<1x32xf32>
    %c0_47 = arith.constant 0 : index
    %c0_48 = arith.constant 0 : index
    %133 = vector.load %arg10[%c0_47, %c0_48] : memref<1x32xf32, #tpu.memory_space<vmem>>, vector<1x32xf32>
    %cst_49 = arith.constant dense<0.000000e+00> : vector<4xf32>
    %134 = vector.multi_reduction <add>, %131, %cst_49 [1] : vector<4x32xf32> to vector<4xf32>
    %135 = vector.shape_cast %134 : vector<4xf32> to vector<4x1xf32>
    %cst_50 = arith.constant 3.200000e+01 : f32
    %136 = vector.broadcast %cst_50 : f32 to vector<4x1xf32>
    %137 = arith.divf %135, %136 : vector<4x1xf32>
    %138 = vector.broadcast %137 : vector<4x1xf32> to vector<4x32xf32>
    %139 = arith.subf %131, %138 : vector<4x32xf32>
    %140 = arith.mulf %139, %139 : vector<4x32xf32>
    %cst_51 = arith.constant dense<0.000000e+00> : vector<4xf32>
    %141 = vector.multi_reduction <add>, %140, %cst_51 [1] : vector<4x32xf32> to vector<4xf32>
    %142 = vector.shape_cast %141 : vector<4xf32> to vector<4x1xf32>
    %cst_52 = arith.constant 3.200000e+01 : f32
    %143 = vector.broadcast %cst_52 : f32 to vector<4x1xf32>
    %144 = arith.divf %142, %143 : vector<4x1xf32>
    %145 = vector.broadcast %137 : vector<4x1xf32> to vector<4x32xf32>
    %146 = arith.subf %131, %145 : vector<4x32xf32>
    %cst_53 = arith.constant 9.99999996E-13 : f32
    %147 = vector.broadcast %cst_53 : f32 to vector<4x1xf32>
    %148 = arith.addf %144, %147 : vector<4x1xf32>
    %149 = math.rsqrt %148 : vector<4x1xf32>
    %150 = vector.broadcast %149 : vector<4x1xf32> to vector<4x32xf32>
    %151 = arith.mulf %146, %150 : vector<4x32xf32>
    %152 = vector.broadcast %132 : vector<1x32xf32> to vector<4x32xf32>
    %153 = arith.mulf %151, %152 : vector<4x32xf32>
    %154 = vector.broadcast %133 : vector<1x32xf32> to vector<4x32xf32>
    %155 = arith.addf %153, %154 : vector<4x32xf32>
    %c0_54 = arith.constant 0 : index
    %c0_55 = arith.constant 0 : index
    %156 = vector.load %arg11[%c0_54, %c0_55] : memref<32x48xf32, #tpu.memory_space<vmem>>, vector<32x48xf32>
    %cst_56 = arith.constant dense<0.000000e+00> : vector<4x48xf32>
    %157 = tpu.matmul %155, %156, %cst_56 {dimension_numbers = #tpu.dot_dimension_numbers<[1], [0], [0], [1], [0, 0, 1, 1], [], []>} : vector<4x32xf32>, vector<32x48xf32>, vector<4x48xf32> -> vector<4x48xf32>
    %c0_57 = arith.constant 0 : index
    %c0_58 = arith.constant 0 : index
    %158 = vector.load %arg12[%c0_57, %c0_58] : memref<1x48xf32, #tpu.memory_space<vmem>>, vector<1x48xf32>
    %159 = vector.broadcast %158 : vector<1x48xf32> to vector<4x48xf32>
    %160 = arith.addf %157, %159 : vector<4x48xf32>
    %cst_59 = arith.constant 0.000000e+00 : f32
    %161 = vector.broadcast %cst_59 : f32 to vector<4x48xf32>
    %162 = arith.maximumf %160, %161 : vector<4x48xf32>
    %c0_60 = arith.constant 0 : index
    %c0_61 = arith.constant 0 : index
    %163 = vector.load %arg13[%c0_60, %c0_61] : memref<48x32xf32, #tpu.memory_space<vmem>>, vector<48x32xf32>
    %cst_62 = arith.constant dense<0.000000e+00> : vector<4x32xf32>
    %164 = tpu.matmul %162, %163, %cst_62 {dimension_numbers = #tpu.dot_dimension_numbers<[1], [0], [0], [1], [0, 0, 1, 1], [], []>} : vector<4x48xf32>, vector<48x32xf32>, vector<4x32xf32> -> vector<4x32xf32>
    %c0_63 = arith.constant 0 : index
    %c0_64 = arith.constant 0 : index
    %165 = vector.load %arg14[%c0_63, %c0_64] : memref<1x32xf32, #tpu.memory_space<vmem>>, vector<1x32xf32>
    %166 = vector.broadcast %165 : vector<1x32xf32> to vector<4x32xf32>
    %167 = arith.addf %164, %166 : vector<4x32xf32>
    %168 = arith.addf %131, %167 : vector<4x32xf32>
    %c0_65 = arith.constant 0 : index
    %c0_66 = arith.constant 0 : index
    %c0_67 = arith.constant 0 : index
    %169 = vector.load %arg15[%c0_65, %c0_66, %c0_67] : memref<1x4x32xf32, #tpu.memory_space<vmem>>, vector<1x4x32xf32>
    %170 = vector.shape_cast %169 : vector<1x4x32xf32> to vector<4x32xf32>
    %171 = vector.shape_cast %168 : vector<4x32xf32> to vector<1x4x32xf32>
    tpu.vector_store %arg15[%c0_65, %c0_66, %c0_67], %171 {strides = array<i32>} : memref<1x4x32xf32, #tpu.memory_space<vmem>>, vector<1x4x32xf32>,
    return
  }
  func.func @transform_0(%arg0: i32) -> (i32, i32, i32) {
    %c0_i32 = arith.constant 0 : i32
    %c0_i32_0 = arith.constant 0 : i32
    %c0_i32_1 = arith.constant 0 : i32
    return %arg0, %c0_i32, %c0_i32_0 : i32, i32, i32
  }
  func.func @transform_1(%arg0: i32) -> (i32, i32, i32) {
    %c0_i32 = arith.constant 0 : i32
    %c0_i32_0 = arith.constant 0 : i32
    %c0_i32_1 = arith.constant 0 : i32
    return %arg0, %c0_i32, %c0_i32_0 : i32, i32, i32
  }
  func.func @transform_2(%arg0: i32) -> (i32, i32) {
    %c0_i32 = arith.constant 0 : i32
    %c0_i32_0 = arith.constant 0 : i32
    %c0_i32_1 = arith.constant 0 : i32
    return %c0_i32, %c0_i32_0 : i32, i32
  }
  func.func @transform_3(%arg0: i32) -> (i32, i32) {
    %c0_i32 = arith.constant 0 : i32
    %c0_i32_0 = arith.constant 0 : i32
    %c0_i32_1 = arith.constant 0 : i32
    return %c0_i32, %c0_i32_0 : i32, i32
  }
  func.func @transform_4(%arg0: i32) -> (i32, i32) {
    %c0_i32 = arith.constant 0 : i32
    %c0_i32_0 = arith.constant 0 : i32
    %c0_i32_1 = arith.constant 0 : i32
    return %c0_i32, %c0_i32_0 : i32, i32
  }
  func.func @transform_5(%arg0: i32) -> (i32, i32) {
    %c0_i32 = arith.constant 0 : i32
    %c0_i32_0 = arith.constant 0 : i32
    %c0_i32_1 = arith.constant 0 : i32
    return %c0_i32, %c0_i32_0 : i32, i32
  }
  func.func @transform_6(%arg0: i32) -> (i32, i32) {
    %c0_i32 = arith.constant 0 : i32
    %c0_i32_0 = arith.constant 0 : i32
    %c0_i32_1 = arith.constant 0 : i32
    return %c0_i32, %c0_i32_0 : i32, i32
  }
  func.func @transform_7(%arg0: i32) -> (i32, i32) {
    %c0_i32 = arith.constant 0 : i32
    %c0_i32_0 = arith.constant 0 : i32
    %c0_i32_1 = arith.constant 0 : i32
    return %c0_i32, %c0_i32_0 : i32, i32
  }
  func.func @transform_8(%arg0: i32) -> (i32, i32) {
    %c0_i32 = arith.constant 0 : i32
    %c0_i32_0 = arith.constant 0 : i32
    %c0_i32_1 = arith.constant 0 : i32
    return %c0_i32, %c0_i32_0 : i32, i32
  }
  func.func @transform_9(%arg0: i32) -> (i32, i32) {
    %c0_i32 = arith.constant 0 : i32
    %c0_i32_0 = arith.constant 0 : i32
    %c0_i32_1 = arith.constant 0 : i32
    return %c0_i32, %c0_i32_0 : i32, i32
  }
  func.func @transform_10(%arg0: i32) -> (i32, i32) {
    %c0_i32 = arith.constant 0 : i32
    %c0_i32_0 = arith.constant 0 : i32
    %c0_i32_1 = arith.constant 0 : i32
    return %c0_i32, %c0_i32_0 : i32, i32
  }
  func.func @transform_11(%arg0: i32) -> (i32, i32) {
    %c0_i32 = arith.constant 0 : i32
    %c0_i32_0 = arith.constant 0 : i32
    %c0_i32_1 = arith.constant 0 : i32
    return %c0_i32, %c0_i32_0 : i32, i32
  }
  func.func @transform_12(%arg0: i32) -> (i32, i32) {
    %c0_i32 = arith.constant 0 : i32
    %c0_i32_0 = arith.constant 0 : i32
    %c0_i32_1 = arith.constant 0 : i32
    return %c0_i32, %c0_i32_0 : i32, i32
  }
  func.func @transform_13(%arg0: i32) -> (i32, i32) {
    %c0_i32 = arith.constant 0 : i32
    %c0_i32_0 = arith.constant 0 : i32
    %c0_i32_1 = arith.constant 0 : i32
    return %c0_i32, %c0_i32_0 : i32, i32
  }
  func.func @transform_14(%arg0: i32) -> (i32, i32, i32) {
    %c0_i32 = arith.constant 0 : i32
    %c0_i32_0 = arith.constant 0 : i32
    %c0_i32_1 = arith.constant 0 : i32
    return %arg0, %c0_i32, %c0_i32_0 : i32, i32, i32
  }
}

</mosaic_0001>

<llo_original>
// kernel: _lambda_.6
$region0: #{_lambda_.6}
  #allocation0 [shape = 'u32[]', space=smem, size = 0x4, offset = 0x4, fixed_abs, tag = 'smem constant byte address 0x4 - core index']
  #allocation1 [shape = 'u32[72,128]{1,0:T(1,128)}', space=vmem, size = 0x9000, scoped, tag = 'internal scratch']
  %s0 = inlined_call_operand.vmem [shape: f32[162,9], index: 0, kind: input, shape index: {}]
  %s1 = inlined_call_operand.vmem [shape: f32[9,32], index: 1, kind: input, shape index: {}]
  %s2 = inlined_call_operand.vmem [shape: f32[1,32], index: 2, kind: input, shape index: {}]
  %s3 = inlined_call_operand.vmem [shape: f32[162,32], index: 3, kind: output, shape index: {}]
  %s4 = sld [smem:[#allocation0]]
  $region22: #{_lambda_.6} parent=0
    _
  %s6 = ssub.s32 1, %s4
  %s7 = scalar_select 0, %s6, %s4
  // Predicated region
  $region2: #{_lambda_.6} parent=0 // pred_check
    _
  $region3: #{_lambda_.6} parent=0 // pred_check_branch
    %9 = sbr.rel (0) target = $region5
  $region4: #{_lambda_.6} parent=0 // pred_region
    _
  $region5: #{_lambda_.6} parent=0 // pred_fallthru
    _
  // Predicated region
  $region6: #{_lambda_.6} parent=0 // pred_check
    _
  $region7: #{_lambda_.6} parent=0 // pred_check_branch
    %11 = sbr.rel (0) target = $region9
  $region8: #{_lambda_.6} parent=0 // pred_region
    _
  $region9: #{_lambda_.6} parent=0 // pred_fallthru
    _
  // Predicated region
  $region10: #{_lambda_.6} parent=0 // pred_check
    _
  $region11: #{_lambda_.6} parent=0 // pred_check_branch
    %13 = sbr.rel (0) target = $region13
  $region12: #{_lambda_.6} parent=0 // pred_region
    _
  $region13: #{_lambda_.6} parent=0 // pred_fallthru
    _
  %v14 = vld [vmem:[%s0] sm:$0xff]
  %v15 = vld [vmem:[%s0 + $0x8] sm:$0xff]
  %v16 = vld [vmem:[%s0 + $0x10] sm:$0xff]
  %v17 = vld [vmem:[%s0 + $0x18] sm:$0xff]
  %v18 = vld [vmem:[%s0 + $0x20] sm:$0xff]
  %v19 = vld [vmem:[%s0 + $0x28] sm:$0xff]
  %v20 = vld [vmem:[%s0 + $0x30] sm:$0xff]
  %v21 = vld [vmem:[%s0 + $0x38] sm:$0xff]
  %v22 = vld [vmem:[%s0 + $0x40] sm:$0xff]
  %v23 = vld [vmem:[%s0 + $0x48] sm:$0xff]
  %v24 = vld [vmem:[%s0 + $0x50] sm:$0xff]
  %v25 = vld [vmem:[%s0 + $0x58] sm:$0xff]
  %v26 = vld [vmem:[%s0 + $0x60] sm:$0xff]
  %v27 = vld [vmem:[%s0 + $0x68] sm:$0xff]
  %v28 = vld [vmem:[%s0 + $0x70] sm:$0xff]
  %v29 = vld [vmem:[%s0 + $0x78] sm:$0xff]
  %v30 = vld [vmem:[%s0 + $0x80] sm:$0xff]
  %v31 = vld [vmem:[%s0 + $0x88] sm:$0xff]
  %v32 = vld [vmem:[%s0 + $0x90] sm:$0xff]
  %v33 = vld [vmem:[%s0 + $0x98] sm:$0xff]
  %v34 = vld [vmem:[%s0 + $0xa0] sm:$0x3]
  %v35 = vld [vmem:[%s1] sm:$0xff]
  %v36 = vld [vmem:[%s1 + $0x8] sm:$0x1]
  %v37 = vld [vmem:[%s2] sm:$0x1]
  %v39 = vperm.slane %v37, 0
  %vm41 = vcmask 72704
  %v43 = vsel %vm41, %v14, 0
  %v46 = vsel %vm41, %v15, 0
  %v49 = vsel %vm41, %v16, 0
  %v52 = vsel %vm41, %v17, 0
  %v55 = vsel %vm41, %v18, 0
  %v58 = vsel %vm41, %v19, 0
  %v61 = vsel %vm41, %v20, 0
  %v64 = vsel %vm41, %v21, 0
  %v67 = vsel %vm41, %v22, 0
  %v70 = vsel %vm41, %v23, 0
  %v73 = vsel %vm41, %v24, 0
  %v76 = vsel %vm41, %v25, 0
  %v79 = vsel %vm41, %v26, 0
  %v82 = vsel %vm41, %v27, 0
  %v85 = vsel %vm41, %v28, 0
  %v88 = vsel %vm41, %v29, 0
  %v91 = vsel %vm41, %v30, 0
  %v94 = vsel %vm41, %v31, 0
  %v97 = vsel %vm41, %v32, 0
  %v100 = vsel %vm41, %v33, 0
  %v103 = vsel %vm41, %v34, 0
  %vm105 = vcmask 1040384
  %v107 = vsel %vm105, %v36, 0
  %109 = vmatpush.msra.mxu0 0.0
  %110 = vmatpush.msra.mxu0 0.0
  %111 = vmatpush.msra.mxu0 0.0
  %112 = vmatpush.msra.mxu0 0.0
  %113 = vmatpush.msra.mxu0 0.0
  %114 = vmatpush.msra.mxu0 0.0
  %115 = vmatpush.msra.mxu0 0.0
  %116 = vmatpush.msra.mxu0 0.0
  %117 = vmatpush.msra.mxu0 0.0
  %118 = vmatpush.msra.mxu0 0.0
  %119 = vmatpush.msra.mxu0 0.0
  %120 = vmatpush.msra.mxu0 0.0
  %121 = vmatpush.msra.mxu0 0.0
  %122 = vmatpush.msra.mxu0 0.0
  %123 = vmatpush.msra.mxu0 %v107
  %124 = vmatpush.msra.mxu0 %v35
  %125 = vmatmul.f32.gmra.mxu0 %v43
  %v126 = vpop.f32.mrf.mxu0
  %v127 = vadd.f32 %v39, %v126
  %128 = vmatmul.f32.gmra.mxu0 %v46
  %v129 = vpop.f32.mrf.mxu0
  %v130 = vadd.f32 %v39, %v129
  %131 = vmatmul.f32.gmra.mxu0 %v49
  %v132 = vpop.f32.mrf.mxu0
  %v133 = vadd.f32 %v39, %v132
  %134 = vmatmul.f32.gmra.mxu0 %v52
  %v135 = vpop.f32.mrf.mxu0
  %v136 = vadd.f32 %v39, %v135
  %137 = vmatmul.f32.gmra.mxu0 %v55
  %v138 = vpop.f32.mrf.mxu0
  %v139 = vadd.f32 %v39, %v138
  %140 = vmatmul.f32.gmra.mxu0 %v58
  %v141 = vpop.f32.mrf.mxu0
  %v142 = vadd.f32 %v39, %v141
  %143 = vmatmul.f32.gmra.mxu0 %v61
  %v144 = vpop.f32.mrf.mxu0
  %v145 = vadd.f32 %v39, %v144
  %146 = vmatmul.f32.gmra.mxu0 %v64
  %v147 = vpop.f32.mrf.mxu0
  %v148 = vadd.f32 %v39, %v147
  %149 = vmatmul.f32.gmra.mxu0 %v67
  %v150 = vpop.f32.mrf.mxu0
  %v151 = vadd.f32 %v39, %v150
  %152 = vmatmul.f32.gmra.mxu0 %v70
  %v153 = vpop.f32.mrf.mxu0
  %v154 = vadd.f32 %v39, %v153
  %155 = vmatmul.f32.gmra.mxu0 %v73
  %v156 = vpop.f32.mrf.mxu0
  %v157 = vadd.f32 %v39, %v156
  %158 = vmatmul.f32.gmra.mxu0 %v76
  %v159 = vpop.f32.mrf.mxu0
  %v160 = vadd.f32 %v39, %v159
  %161 = vmatmul.f32.gmra.mxu0 %v79
  %v162 = vpop.f32.mrf.mxu0
  %v163 = vadd.f32 %v39, %v162
  %164 = vmatmul.f32.gmra.mxu0 %v82
  %v165 = vpop.f32.mrf.mxu0
  %v166 = vadd.f32 %v39, %v165
  %167 = vmatmul.f32.gmra.mxu0 %v85
  %v168 = vpop.f32.mrf.mxu0
  %v169 = vadd.f32 %v39, %v168
  %170 = vmatmul.f32.gmra.mxu0 %v88
  %v171 = vpop.f32.mrf.mxu0
  %v172 = vadd.f32 %v39, %v171
  %173 = vmatmul.f32.gmra.mxu0 %v91
  %v174 = vpop.f32.mrf.mxu0
  %v175 = vadd.f32 %v39, %v174
  %176 = vmatmul.f32.gmra.mxu0 %v94
  %v177 = vpop.f32.mrf.mxu0
  %v178 = vadd.f32 %v39, %v177
  %179 = vmatmul.f32.gmra.mxu0 %v97
  %v180 = vpop.f32.mrf.mxu0
  %v181 = vadd.f32 %v39, %v180
  %182 = vmatmul.f32.gmra.mxu0 %v100
  %v183 = vpop.f32.mrf.mxu0
  %v184 = vadd.f32 %v39, %v183
  %185 = vmatmul.f32.gmra.mxu0 %v103
  %v186 = vpop.f32.mrf.mxu0
  %v187 = vadd.f32 %v39, %v186
  %188 = vdwg.mxu0
  %v189 = vmax.f32 %v127, 0.0
  %v190 = vmax.f32 %v130, 0.0
  %v191 = vmax.f32 %v133, 0.0
  %v192 = vmax.f32 %v136, 0.0
  %v193 = vmax.f32 %v139, 0.0
  %v194 = vmax.f32 %v142, 0.0
  %v195 = vmax.f32 %v145, 0.0
  %v196 = vmax.f32 %v148, 0.0
  %v197 = vmax.f32 %v151, 0.0
  %v198 = vmax.f32 %v154, 0.0
  %v199 = vmax.f32 %v157, 0.0
  %v200 = vmax.f32 %v160, 0.0
  %v201 = vmax.f32 %v163, 0.0
  %v202 = vmax.f32 %v166, 0.0
  %v203 = vmax.f32 %v169, 0.0
  %v204 = vmax.f32 %v172, 0.0
  %v205 = vmax.f32 %v175, 0.0
  %v206 = vmax.f32 %v178, 0.0
  %v207 = vmax.f32 %v181, 0.0
  %v208 = vmax.f32 %v184, 0.0
  %v209 = vmax.f32 %v187, 0.0
  %vm210 = vcmask 261120
  %211 = vst.msk [vmem:[%s3] sm:$0xff] %vm210, %v189
  %212 = vst.msk [vmem:[%s3 + $0x8] sm:$0xff] %vm210, %v190
  %213 = vst.msk [vmem:[%s3 + $0x10] sm:$0xff] %vm210, %v191
  %214 = vst.msk [vmem:[%s3 + $0x18] sm:$0xff] %vm210, %v192
  %215 = vst.msk [vmem:[%s3 + $0x20] sm:$0xff] %vm210, %v193
  %216 = vst.msk [vmem:[%s3 + $0x28] sm:$0xff] %vm210, %v194
  %217 = vst.msk [vmem:[%s3 + $0x30] sm:$0xff] %vm210, %v195
  %218 = vst.msk [vmem:[%s3 + $0x38] sm:$0xff] %vm210, %v196
  %219 = vst.msk [vmem:[%s3 + $0x40] sm:$0xff] %vm210, %v197
  %220 = vst.msk [vmem:[%s3 + $0x48] sm:$0xff] %vm210, %v198
  %221 = vst.msk [vmem:[%s3 + $0x50] sm:$0xff] %vm210, %v199
  %222 = vst.msk [vmem:[%s3 + $0x58] sm:$0xff] %vm210, %v200
  %223 = vst.msk [vmem:[%s3 + $0x60] sm:$0xff] %vm210, %v201
  %224 = vst.msk [vmem:[%s3 + $0x68] sm:$0xff] %vm210, %v202
  %225 = vst.msk [vmem:[%s3 + $0x70] sm:$0xff] %vm210, %v203
  %226 = vst.msk [vmem:[%s3 + $0x78] sm:$0xff] %vm210, %v204
  %227 = vst.msk [vmem:[%s3 + $0x80] sm:$0xff] %vm210, %v205
  %228 = vst.msk [vmem:[%s3 + $0x88] sm:$0xff] %vm210, %v206
  %229 = vst.msk [vmem:[%s3 + $0x90] sm:$0xff] %vm210, %v207
  %230 = vst.msk [vmem:[%s3 + $0x98] sm:$0xff] %vm210, %v208
  %vm231 = vcmask 254976
  %232 = vst.msk [vmem:[%s3 + $0xa0] sm:$0x3] %vm231, %v209
  // Predicated region
  $region14: #{_lambda_.6} parent=0 // pred_check
    _
  $region15: #{_lambda_.6} parent=0 // pred_check_branch
    %234 = sbr.rel (0) target = $region17
  $region16: #{_lambda_.6} parent=0 // pred_region
    _
  $region17: #{_lambda_.6} parent=0 // pred_fallthru
    _
  // Predicated region
  $region18: #{_lambda_.6} parent=0 // pred_check
    _
  $region19: #{_lambda_.6} parent=0 // pred_check_branch
    %236 = sbr.rel (0) target = $region21
  $region20: #{_lambda_.6} parent=0 // pred_region
    _
  $region21: #{_lambda_.6} parent=0 // pred_fallthru
    _

// kernel: _lambda_.7
$region0: #{_lambda_.7}
  #allocation0 [shape = 'u32[]', space=smem, size = 0x4, offset = 0x4, fixed_abs, tag = 'smem constant byte address 0x4 - core index']
  #allocation1 [shape = 'u32[72,128]{1,0:T(1,128)}', space=vmem, size = 0x9000, scoped, tag = 'internal scratch']
  %s0 = inlined_call_operand.vmem [shape: f32[32,288], index: 0, kind: input, shape index: {}]
  %s1 = inlined_call_operand.vmem [shape: f32[288,32], index: 1, kind: input, shape index: {}]
  %s2 = inlined_call_operand.vmem [shape: f32[1,32], index: 2, kind: input, shape index: {}]
  %s3 = inlined_call_operand.vmem [shape: f32[32,32], index: 3, kind: output, shape index: {}]
  %s4 = sld [smem:[#allocation0]]
  $region22: #{_lambda_.7} parent=0
    _
  %s6 = ssub.s32 1, %s4
  %s7 = scalar_select 0, %s6, %s4
  // Predicated region
  $region2: #{_lambda_.7} parent=0 // pred_check
    _
  $region3: #{_lambda_.7} parent=0 // pred_check_branch
    %9 = sbr.rel (0) target = $region5
  $region4: #{_lambda_.7} parent=0 // pred_region
    _
  $region5: #{_lambda_.7} parent=0 // pred_fallthru
    _
  // Predicated region
  $region6: #{_lambda_.7} parent=0 // pred_check
    _
  $region7: #{_lambda_.7} parent=0 // pred_check_branch
    %11 = sbr.rel (0) target = $region9
  $region8: #{_lambda_.7} parent=0 // pred_region
    _
  $region9: #{_lambda_.7} parent=0 // pred_fallthru
    _
  // Predicated region
  $region10: #{_lambda_.7} parent=0 // pred_check
    _
  $region11: #{_lambda_.7} parent=0 // pred_check_branch
    %13 = sbr.rel (0) target = $region13
  $region12: #{_lambda_.7} parent=0 // pred_region
    _
  $region13: #{_lambda_.7} parent=0 // pred_fallthru
    _
  %v14 = vld [vmem:[%s0] sm:$0xff]
  %v15 = vld [vmem:[%s0 + $0x8] sm:$0xff]
  %v16 = vld [vmem:[%s0 + $0x10] sm:$0xff]
  %v17 = vld [vmem:[%s0 + $0x18] sm:$0xff]
  %v18 = vld [vmem:[%s0 + $0x20] sm:$0xff]
  %v19 = vld [vmem:[%s0 + $0x28] sm:$0xff]
  %v20 = vld [vmem:[%s0 + $0x30] sm:$0xff]
  %v21 = vld [vmem:[%s0 + $0x38] sm:$0xff]
  %v22 = vld [vmem:[%s0 + $0x40] sm:$0xff]
  %v23 = vld [vmem:[%s0 + $0x48] sm:$0xff]
  %v24 = vld [vmem:[%s0 + $0x50] sm:$0xff]
  %v25 = vld [vmem:[%s0 + $0x58] sm:$0xff]
  %v26 = vld [vmem:[%s1] sm:$0xff]
  %v27 = vld [vmem:[%s1 + $0x8] sm:$0xff]
  %v28 = vld [vmem:[%s1 + $0x10] sm:$0xff]
  %v29 = vld [vmem:[%s1 + $0x18] sm:$0xff]
  %v30 = vld [vmem:[%s1 + $0x20] sm:$0xff]
  %v31 = vld [vmem:[%s1 + $0x28] sm:$0xff]
  %v32 = vld [vmem:[%s1 + $0x30] sm:$0xff]
  %v33 = vld [vmem:[%s1 + $0x38] sm:$0xff]
  %v34 = vld [vmem:[%s1 + $0x40] sm:$0xff]
  %v35 = vld [vmem:[%s1 + $0x48] sm:$0xff]
  %v36 = vld [vmem:[%s1 + $0x50] sm:$0xff]
  %v37 = vld [vmem:[%s1 + $0x58] sm:$0xff]
  %v38 = vld [vmem:[%s1 + $0x60] sm:$0xff]
  %v39 = vld [vmem:[%s1 + $0x68] sm:$0xff]
  %v40 = vld [vmem:[%s1 + $0x70] sm:$0xff]
  %v41 = vld [vmem:[%s1 + $0x78] sm:$0xff]
  %v42 = vld [vmem:[%s1 + $0x80] sm:$0xff]
  %v43 = vld [vmem:[%s1 + $0x88] sm:$0xff]
  %v44 = vld [vmem:[%s1 + $0x90] sm:$0xff]
  %v45 = vld [vmem:[%s1 + $0x98] sm:$0xff]
  %v46 = vld [vmem:[%s1 + $0xa0] sm:$0xff]
  %v47 = vld [vmem:[%s1 + $0xa8] sm:$0xff]
  %v48 = vld [vmem:[%s1 + $0xb0] sm:$0xff]
  %v49 = vld [vmem:[%s1 + $0xb8] sm:$0xff]
  %v50 = vld [vmem:[%s1 + $0xc0] sm:$0xff]
  %v51 = vld [vmem:[%s1 + $0xc8] sm:$0xff]
  %v52 = vld [vmem:[%s1 + $0xd0] sm:$0xff]
  %v53 = vld [vmem:[%s1 + $0xd8] sm:$0xff]
  %v54 = vld [vmem:[%s1 + $0xe0] sm:$0xff]
  %v55 = vld [vmem:[%s1 + $0xe8] sm:$0xff]
  %v56 = vld [vmem:[%s1 + $0xf0] sm:$0xff]
  %v57 = vld [vmem:[%s1 + $0xf8] sm:$0xff]
  %v58 = vld [vmem:[%s1 + $0x100] sm:$0xff]
  %v59 = vld [vmem:[%s1 + $0x108] sm:$0xff]
  %v60 = vld [vmem:[%s1 + $0x110] sm:$0xff]
  %v61 = vld [vmem:[%s1 + $0x118] sm:$0xff]
  %v62 = vld [vmem:[%s2] sm:$0x1]
  %v64 = vperm.slane %v62, 0
  %vm66 = vcmask 261120
  %v68 = vsel %vm66, %v16, 0
  %v71 = vsel %vm66, %v19, 0
  %v74 = vsel %vm66, %v22, 0
  %v77 = vsel %vm66, %v25, 0
  %79 = vmatpush.msra.mxu0 %v41
  %80 = vmatpush.msra.mxu0 %v40
  %81 = vmatpush.msra.mxu0 %v39
  %82 = vmatpush.msra.mxu0 %v38
  %83 = vmatpush.msra.mxu0 %v37
  %84 = vmatpush.msra.mxu0 %v36
  %85 = vmatpush.msra.mxu0 %v35
  %86 = vmatpush.msra.mxu0 %v34
  %87 = vmatpush.msra.mxu0 %v33
  %88 = vmatpush.msra.mxu0 %v32
  %89 = vmatpush.msra.mxu0 %v31
  %90 = vmatpush.msra.mxu0 %v30
  %91 = vmatpush.msra.mxu0 %v29
  %92 = vmatpush.msra.mxu0 %v28
  %93 = vmatpush.msra.mxu0 %v27
  %94 = vmatpush.msra.mxu0 %v26
  %95 = vmatmul.f32.gmra.mxu0 %v14
  %v96 = vpop.f32.mrf.mxu0
  %v97 = vadd.f32 %v64, %v96
  %98 = vmatmul.f32.gmra.mxu0 %v17
  %v99 = vpop.f32.mrf.mxu0
  %v100 = vadd.f32 %v64, %v99
  %101 = vmatmul.f32.gmra.mxu0 %v20
  %v102 = vpop.f32.mrf.mxu0
  %v103 = vadd.f32 %v64, %v102
  %104 = vmatmul.f32.gmra.mxu0 %v23
  %v105 = vpop.f32.mrf.mxu0
  %v106 = vadd.f32 %v64, %v105
  %107 = vdwg.mxu0
  %108 = vmatpush.msra.mxu0 %v57
  %109 = vmatpush.msra.mxu0 %v56
  %110 = vmatpush.msra.mxu0 %v55
  %111 = vmatpush.msra.mxu0 %v54
  %112 = vmatpush.msra.mxu0 %v53
  %113 = vmatpush.msra.mxu0 %v52
  %114 = vmatpush.msra.mxu0 %v51
  %115 = vmatpush.msra.mxu0 %v50
  %116 = vmatpush.msra.mxu0 %v49
  %117 = vmatpush.msra.mxu0 %v48
  %118 = vmatpush.msra.mxu0 %v47
  %119 = vmatpush.msra.mxu0 %v46
  %120 = vmatpush.msra.mxu0 %v45
  %121 = vmatpush.msra.mxu0 %v44
  %122 = vmatpush.msra.mxu0 %v43
  %123 = vmatpush.msra.mxu0 %v42
  %124 = vmatmul.f32.gmra.mxu0 %v15
  %v125 = vpop.f32.mrf.mxu0
  %v126 = vadd.f32 %v97, %v125
  %127 = vmatmul.f32.gmra.mxu0 %v18
  %v128 = vpop.f32.mrf.mxu0
  %v129 = vadd.f32 %v100, %v128
  %130 = vmatmul.f32.gmra.mxu0 %v21
  %v131 = vpop.f32.mrf.mxu0
  %v132 = vadd.f32 %v103, %v131
  %133 = vmatmul.f32.gmra.mxu0 %v24
  %v134 = vpop.f32.mrf.mxu0
  %v135 = vadd.f32 %v106, %v134
  %136 = vdwg.mxu0
  %137 = vmatpush.msra.mxu0 0.0
  %138 = vmatpush.msra.mxu0 0.0
  %139 = vmatpush.msra.mxu0 0.0
  %140 = vmatpush.msra.mxu0 0.0
  %141 = vmatpush.msra.mxu0 0.0
  %142 = vmatpush.msra.mxu0 0.0
  %143 = vmatpush.msra.mxu0 0.0
  %144 = vmatpush.msra.mxu0 0.0
  %145 = vmatpush.msra.mxu0 0.0
  %146 = vmatpush.msra.mxu0 0.0
  %147 = vmatpush.msra.mxu0 0.0
  %148 = vmatpush.msra.mxu0 0.0
  %149 = vmatpush.msra.mxu0 %v61
  %150 = vmatpush.msra.mxu0 %v60
  %151 = vmatpush.msra.mxu0 %v59
  %152 = vmatpush.msra.mxu0 %v58
  %153 = vmatmul.f32.gmra.mxu0 %v68
  %v154 = vpop.f32.mrf.mxu0
  %v155 = vadd.f32 %v126, %v154
  %156 = vmatmul.f32.gmra.mxu0 %v71
  %v157 = vpop.f32.mrf.mxu0
  %v158 = vadd.f32 %v129, %v157
  %159 = vmatmul.f32.gmra.mxu0 %v74
  %v160 = vpop.f32.mrf.mxu0
  %v161 = vadd.f32 %v132, %v160
  %162 = vmatmul.f32.gmra.mxu0 %v77
  %v163 = vpop.f32.mrf.mxu0
  %v164 = vadd.f32 %v135, %v163
  %165 = vdwg.mxu0
  %v166 = vmax.f32 %v155, 0.0
  %v167 = vmax.f32 %v158, 0.0
  %v168 = vmax.f32 %v161, 0.0
  %v169 = vmax.f32 %v164, 0.0
  %170 = vst.msk [vmem:[%s3] sm:$0xff] %vm66, %v166
  %171 = vst.msk [vmem:[%s3 + $0x8] sm:$0xff] %vm66, %v167
  %172 = vst.msk [vmem:[%s3 + $0x10] sm:$0xff] %vm66, %v168
  %173 = vst.msk [vmem:[%s3 + $0x18] sm:$0xff] %vm66, %v169
  // Predicated region
  $region14: #{_lambda_.7} parent=0 // pred_check
    _
  $region15: #{_lambda_.7} parent=0 // pred_check_branch
    %175 = sbr.rel (0) target = $region17
  $region16: #{_lambda_.7} parent=0 // pred_region
    _
  $region17: #{_lambda_.7} parent=0 // pred_fallthru
    _
  // Predicated region
  $region18: #{_lambda_.7} parent=0 // pred_check
    _
  $region19: #{_lambda_.7} parent=0 // pred_check_branch
    %177 = sbr.rel (0) target = $region21
  $region20: #{_lambda_.7} parent=0 // pred_region
    _
  $region21: #{_lambda_.7} parent=0 // pred_fallthru
    _

// kernel: _lambda_.8
$region0: #{_lambda_.8}
  #allocation0 [shape = 'u32[]', space=smem, size = 0x4, offset = 0x4, fixed_abs, tag = 'smem constant byte address 0x4 - core index']
  #allocation1 [shape = 'u32[72,128]{1,0:T(1,128)}', space=vmem, size = 0x9000, scoped, tag = 'internal scratch']
  %s0 = inlined_call_operand.vmem [shape: f32[8,128], index: 0, kind: input, shape index: {}]
  %s1 = inlined_call_operand.vmem [shape: f32[128,32], index: 1, kind: input, shape index: {}]
  %s2 = inlined_call_operand.vmem [shape: f32[1,32], index: 2, kind: input, shape index: {}]
  %s3 = inlined_call_operand.vmem [shape: f32[8,32], index: 3, kind: output, shape index: {}]
  %s4 = sld [smem:[#allocation0]]
  $region22: #{_lambda_.8} parent=0
    _
  %s6 = ssub.s32 1, %s4
  %s7 = scalar_select 0, %s6, %s4
  // Predicated region
  $region2: #{_lambda_.8} parent=0 // pred_check
    _
  $region3: #{_lambda_.8} parent=0 // pred_check_branch
    %9 = sbr.rel (0) target = $region5
  $region4: #{_lambda_.8} parent=0 // pred_region
    _
  $region5: #{_lambda_.8} parent=0 // pred_fallthru
    _
  // Predicated region
  $region6: #{_lambda_.8} parent=0 // pred_check
    _
  $region7: #{_lambda_.8} parent=0 // pred_check_branch
    %11 = sbr.rel (0) target = $region9
  $region8: #{_lambda_.8} parent=0 // pred_region
    _
  $region9: #{_lambda_.8} parent=0 // pred_fallthru
    _
  // Predicated region
  $region10: #{_lambda_.8} parent=0 // pred_check
    _
  $region11: #{_lambda_.8} parent=0 // pred_check_branch
    %13 = sbr.rel (0) target = $region13
  $region12: #{_lambda_.8} parent=0 // pred_region
    _
  $region13: #{_lambda_.8} parent=0 // pred_fallthru
    _
  %v14 = vld [vmem:[%s0] sm:$0xff]
  %v15 = vld [vmem:[%s1] sm:$0xff]
  %v16 = vld [vmem:[%s1 + $0x8] sm:$0xff]
  %v17 = vld [vmem:[%s1 + $0x10] sm:$0xff]
  %v18 = vld [vmem:[%s1 + $0x18] sm:$0xff]
  %v19 = vld [vmem:[%s1 + $0x20] sm:$0xff]
  %v20 = vld [vmem:[%s1 + $0x28] sm:$0xff]
  %v21 = vld [vmem:[%s1 + $0x30] sm:$0xff]
  %v22 = vld [vmem:[%s1 + $0x38] sm:$0xff]
  %v23 = vld [vmem:[%s1 + $0x40] sm:$0xff]
  %v24 = vld [vmem:[%s1 + $0x48] sm:$0xff]
  %v25 = vld [vmem:[%s1 + $0x50] sm:$0xff]
  %v26 = vld [vmem:[%s1 + $0x58] sm:$0xff]
  %v27 = vld [vmem:[%s1 + $0x60] sm:$0xff]
  %v28 = vld [vmem:[%s1 + $0x68] sm:$0xff]
  %v29 = vld [vmem:[%s1 + $0x70] sm:$0xff]
  %v30 = vld [vmem:[%s1 + $0x78] sm:$0xff]
  %v31 = vld [vmem:[%s2] sm:$0x1]
  %v33 = vperm.slane %v31, 0
  %35 = vmatpush.msra.mxu0 %v30
  %36 = vmatpush.msra.mxu0 %v29
  %37 = vmatpush.msra.mxu0 %v28
  %38 = vmatpush.msra.mxu0 %v27
  %39 = vmatpush.msra.mxu0 %v26
  %40 = vmatpush.msra.mxu0 %v25
  %41 = vmatpush.msra.mxu0 %v24
  %42 = vmatpush.msra.mxu0 %v23
  %43 = vmatpush.msra.mxu0 %v22
  %44 = vmatpush.msra.mxu0 %v21
  %45 = vmatpush.msra.mxu0 %v20
  %46 = vmatpush.msra.mxu0 %v19
  %47 = vmatpush.msra.mxu0 %v18
  %48 = vmatpush.msra.mxu0 %v17
  %49 = vmatpush.msra.mxu0 %v16
  %50 = vmatpush.msra.mxu0 %v15
  %51 = vmatmul.f32.gmra.mxu0 %v14
  %v52 = vpop.f32.mrf.mxu0
  %v53 = vadd.f32 %v33, %v52
  %54 = vdwg.mxu0
  %vm55 = vcmask 261120
  %56 = vst.msk [vmem:[%s3] sm:$0xff] %vm55, %v53
  // Predicated region
  $region14: #{_lambda_.8} parent=0 // pred_check
    _
  $region15: #{_lambda_.8} parent=0 // pred_check_branch
    %58 = sbr.rel (0) target = $region17
  $region16: #{_lambda_.8} parent=0 // pred_region
    _
  $region17: #{_lambda_.8} parent=0 // pred_fallthru
    _
  // Predicated region
  $region18: #{_lambda_.8} parent=0 // pred_check
    _
  $region19: #{_lambda_.8} parent=0 // pred_check_branch
    %60 = sbr.rel (0) target = $region21
  $region20: #{_lambda_.8} parent=0 // pred_region
    _
  $region21: #{_lambda_.8} parent=0 // pred_fallthru
    _

// kernel: _lambda_.11
$region0: #{_lambda_.11}
  #allocation0 [shape = 'u32[]', space=smem, size = 0x4, offset = 0x4, fixed_abs, tag = 'smem constant byte address 0x4 - core index']
  #allocation1 [shape = 'u32[72,128]{1,0:T(1,128)}', space=vmem, size = 0x9000, scoped, tag = 'internal scratch']
  #allocation2 [shape = 'f32[1,1]{1,0:T(1,128)}', space=vmem, size = 0x200, scoped, tag = 'scratch operand']
  #allocation3 [shape = 'f32[1,1]{1,0:T(1,128)}', space=vmem, size = 0x200, scoped, tag = 'scratch operand']
  %s0 = inlined_call_operand.vmem [shape: f32[8,32], index: 0, kind: input, shape index: {}]
  %s1 = inlined_call_operand.vmem [shape: s32[8,1], index: 1, kind: input, shape index: {}]
  %s2 = inlined_call_operand.vmem [shape: f32[1,32], index: 2, kind: input, shape index: {}]
  %s3 = inlined_call_operand.vmem [shape: f32[1,32], index: 3, kind: input, shape index: {}]
  %s4 = inlined_call_operand.vmem [shape: f32[32,8], index: 4, kind: input, shape index: {}]
  %s5 = inlined_call_operand.vmem [shape: f32[1,8], index: 5, kind: input, shape index: {}]
  %s6 = inlined_call_operand.hbm [shape: f32[1,1], index: 6, kind: output, shape index: {}]
  %s7 = sld [smem:[#allocation0]]
  $region42: #{_lambda_.11} parent=0
    _
  %s9 = ssub.s32 1, %s7
  %s10 = scalar_select 0, %s9, %s7
  $region1: #{_lambda_.11} parent=0
    #allocation4 [shape = 'u8[512]{0}', space=vmem, size = 0x400, scoped, tag = 'output window, operand 0, single buffered']
    #allocation5 [shape = 's32[1]{0}', space=sflag, size = 0x4, scoped, tag = 'scoped memory for _lambda_.11']
    %11 = vsyncpa [#allocation5], 0
    // Predicated region
    $region2: #{_lambda_.11} parent=1 // pred_check
      _
    $region3: #{_lambda_.11} parent=1 // pred_check_branch
      %13 = sbr.rel (0) target = $region5
    $region4: #{_lambda_.11} parent=1 // pred_region
      _
    $region5: #{_lambda_.11} parent=1 // pred_fallthru
      _
    // Predicated region
    $region6: #{_lambda_.11} parent=1 // pred_check
      _
    $region7: #{_lambda_.11} parent=1 // pred_check_branch
      %15 = sbr.rel (0) target = $region9
    $region8: #{_lambda_.11} parent=1 // pred_region
      _
    $region9: #{_lambda_.11} parent=1 // pred_fallthru
      _
    // Predicated region
    $region10: #{_lambda_.11} parent=1 // pred_check
      _
    $region11: #{_lambda_.11} parent=1 // pred_check_branch
      %17 = sbr.rel (0) target = $region13
    $region12: #{_lambda_.11} parent=1 // pred_region
      _
    $region13: #{_lambda_.11} parent=1 // pred_fallthru
      _
    // Predicated region
    $region14: #{_lambda_.11} parent=1 // pred_check
      _
    $region15: #{_lambda_.11} parent=1 // pred_check_branch
      %19 = sbr.rel (0) target = $region17
    $region16: #{_lambda_.11} parent=1 // pred_region
      _
    $region17: #{_lambda_.11} parent=1 // pred_fallthru
      _
    // Predicated region
    $region18: #{_lambda_.11} parent=1 // pred_check
      _
    $region19: #{_lambda_.11} parent=1 // pred_check_branch
      %21 = sbr.rel (0) target = $region21
    $region20: #{_lambda_.11} parent=1 // pred_region
      _
    $region21: #{_lambda_.11} parent=1 // pred_fallthru
      _
    // Predicated region
    $region22: #{_lambda_.11} parent=1 // pred_check
      _
    $region23: #{_lambda_.11} parent=1 // pred_check_branch
      %23 = sbr.rel (0) target = $region25
    $region24: #{_lambda_.11} parent=1 // pred_region
      _
    $region25: #{_lambda_.11} parent=1 // pred_fallthru
      _
    %p24 = scmp.eq.s32.totalorder 0, 0
    // Predicated region
    $region26: #{_lambda_.11} parent=1 // pred_check
      %p25 = pneg %p24
    $region27: #{_lambda_.11} parent=1 // pred_check_branch
      %27 = sbr.rel (%p25) target = $region29
    $region28: #{_lambda_.11} parent=1 // pred_region
      %vm28 = vcmask 0
      %29 = vst.msk [vmem:[#allocation2] sm:$0x1] %vm28, 0.0
      %30 = vst.msk [vmem:[#allocation3] sm:$0x1] %vm28, 0.0
    $region29: #{_lambda_.11} parent=1 // pred_fallthru
      _
    %v31 = vld [vmem:[%s0] sm:$0xff]
    %v32 = vld [vmem:[%s1] sm:$0xff]
    %v33 = vld [vmem:[%s2] sm:$0x1]
    %v34 = vld [vmem:[%s3] sm:$0x1]
    %vm35 = vcmask 261120
    %v36 = vsel %vm35, %v31, 0.0
    %37 = vadd.xlane.f32.xlu0 %v36
    %v38 = vpop.xlane.xlu0 %37
    %v39 = vrcp.pop 32.0
    %v40 = vmul.f32 32.0, %v39
    %v41 = vsub.f32 1.0, %v40
    %v42 = vmul.f32 %v39, %v41
    %v43 = vadd.f32 %v39, %v42
    %vm44 = vweird.f32 %v39
    %v45 = vsel %vm44, %v39, %v43
    %v46 = vmul.f32 %v38, %v45
    %v47 = vsub.f32 %v31, %v46
    %v48 = vmul.f32 %v47, %v47
    %v49 = vsel %vm35, %v48, 0.0
    %50 = vadd.xlane.f32.xlu0 %v49
    %v51 = vpop.xlane.xlu0 %50
    %v52 = vmul.f32 %v51, %v45
    %v53 = vadd.f32 %v52, 1e-12
    %v54 = vrsqrt.pop %v53
    %v55 = vmul.f32 %v54, %v53
    %v56 = vmul.f32 %v55, %v54
    %v57 = vmul.f32 0.5, %v56
    %v58 = vsub.f32 1.5, %v57
    %v59 = vmul.f32 %v54, %v58
    %vm60 = vweird.f32 %v53
    %vm61 = vweird.f32 %v54
    %vm62 = vmor %vm60, %vm61
    %v63 = vsel %vm62, %v54, %v59
    %v64 = vmul.f32 %v47, %v63
    %v66 = vperm.slane %v33, 0
    %v68 = vmul.f32 %v64, %v66
    %v70 = vperm.slane %v34, 0
    %v72 = vadd.f32 %v68, %v70
    %v73 = vld [vmem:[%s4] sm:$0xff]
    %v74 = vld [vmem:[%s4 + $0x8] sm:$0xff]
    %v75 = vld [vmem:[%s4 + $0x10] sm:$0xff]
    %v76 = vld [vmem:[%s4 + $0x18] sm:$0xff]
    %v77 = vld [vmem:[%s5] sm:$0x1]
    %v79 = vperm.slane %v77, 0
    %v82 = vsel %vm35, %v72, 0
    %84 = vmatpush.msra.mxu0 0.0
    %85 = vmatpush.msra.mxu0 0.0
    %86 = vmatpush.msra.mxu0 0.0
    %87 = vmatpush.msra.mxu0 0.0
    %88 = vmatpush.msra.mxu0 0.0
    %89 = vmatpush.msra.mxu0 0.0
    %90 = vmatpush.msra.mxu0 0.0
    %91 = vmatpush.msra.mxu0 0.0
    %92 = vmatpush.msra.mxu0 0.0
    %93 = vmatpush.msra.mxu0 0.0
    %94 = vmatpush.msra.mxu0 0.0
    %95 = vmatpush.msra.mxu0 0.0
    %96 = vmatpush.msra.mxu0 %v76
    %97 = vmatpush.msra.mxu0 %v75
    %98 = vmatpush.msra.mxu0 %v74
    %99 = vmatpush.msra.mxu0 %v73
    %100 = vmatmul.f32.gmra.mxu0 %v82
    %v101 = vpop.f32.mrf.mxu0
    %v102 = vadd.f32 %v79, %v101
    %103 = vdwg.mxu0
    %vm104 = vcmask 64512
    %v105 = vsel %vm104, %v102, -inf
    %106 = vmax.xlane.f32.xlu0 %v105
    %v107 = vpop.xlane.xlu0 %106
    %v108 = vsub.f32 %v102, %v107
    %v109 = vmul.f32 %v108, 1.442695
    %v110 = vpow.pop %v109
    %v111 = vsel %vm104, %v110, 0.0
    %112 = vadd.xlane.f32.xlu0 %v111
    %v113 = vpop.xlane.xlu0 %112
    %v114 = vlog2.pop %v113
    %v115 = vmul.f32 %v114, 0.6931472
    %v116 = vsub.f32 %v108, %v115
    %vm117 = vcmp.eq.s32.totalorder %v32, 4294967295
    %v118 = vsel %vm117, 0, %v32
    %v119 = vlaneseq
    %v120 = vand.u32 %v119, 127
    %121 = vset.pattern.permute.xlu0 0
    %122 = vperm.xlu0 %121, %v118
    %v123 = vpop.permute.xlu0 %122
    %vm124 = vcmp.eq.s32.totalorder %v120, %v123
    %v125 = vsel %vm124, %v116, 0.0
    %v126 = vsel %vm104, %v125, 0.0
    %127 = vadd.xlane.f32.xlu0 %v126
    %v128 = vpop.xlane.xlu0 %127
    %v129 = vsel %vm104, %v116, 0.0
    %130 = vadd.xlane.f32.xlu0 %v129
    %v131 = vpop.xlane.xlu0 %130
    %v132 = vmul.f32 %v131, 0.014285714
    %v133 = vmul.f32 %v128, 0.8857143
    %v134 = vadd.f32 %v132, %v133
    %v135 = vsel %vm117, 0.0, 1.0
    %v136 = vld [vmem:[#allocation2] sm:$0x1]
    %v137 = vsub.f32 -0.519674, %v134
    %v138 = vmul.f32 %v137, %v135
    %vm139 = vcmask 7168
    %v140 = vsel %vm139, %v138, 0.0
    %141 = vadd.xlane.f32.xlu0 %v140
    %v142 = vpop.xlane.xlu0 %141
    %v143 = vrot.slane %v142, 4
    %v144 = vadd.f32 %v142, %v143
    %v145 = vrot.slane %v144, 2
    %v146 = vadd.f32 %v144, %v145
    %v147 = vrot.slane %v146, 1
    %v148 = vadd.f32 %v146, %v147
    %s149 = vtos %v148
    %v150 = vstv %s149
    %v151 = vadd.f32 %v136, %v150
    %vm152 = vcmask 0
    %153 = vst.msk [vmem:[#allocation2] sm:$0x1] %vm152, %v151
    %v154 = vld [vmem:[#allocation3] sm:$0x1]
    %v155 = vsel %vm139, %v135, 0.0
    %156 = vadd.xlane.f32.xlu0 %v155
    %v157 = vpop.xlane.xlu0 %156
    %v158 = vrot.slane %v157, 4
    %v159 = vadd.f32 %v157, %v158
    %v160 = vrot.slane %v159, 2
    %v161 = vadd.f32 %v159, %v160
    %v162 = vrot.slane %v161, 1
    %v163 = vadd.f32 %v161, %v162
    %s164 = vtos %v163
    %v165 = vstv %s164
    %v166 = vadd.f32 %v154, %v165
    %167 = vst.msk [vmem:[#allocation3] sm:$0x1] %vm152, %v166
    // Predicated region
    $region30: #{_lambda_.11} parent=1 // pred_check
      %p168 = pneg %p24
    $region31: #{_lambda_.11} parent=1 // pred_check_branch
      %170 = sbr.rel (%p168) target = $region33
    $region32: #{_lambda_.11} parent=1 // pred_region
      %v171 = vld [vmem:[#allocation3] sm:$0x1]
      %v172 = vmax.f32 %v171, 1.0
      %v173 = vld [vmem:[#allocation2] sm:$0x1]
      %v174 = vrcp.pop %v172
      %v175 = vmul.f32 %v172, %v174
      %v176 = vsub.f32 1.0, %v175
      %v177 = vmul.f32 %v174, %v176
      %v178 = vadd.f32 %v174, %v177
      %vm179 = vweird.f32 %v172
      %vm180 = vweird.f32 %v174
      %vm181 = vmor %vm179, %vm180
      %v182 = vsel %vm181, %v174, %v178
      %v183 = vand.u32 2147483647, %v172
      %vm184 = vcmp.eq.f32.partialorder %v183, 8.507059e+37
      %v185 = vand.u32 %v172, 2147483648
      %v186 = vor.u32 1.1754944e-38, %v185
      %v187 = vsel %vm184, %v186, %v182
      %v188 = vmul.f32 %v173, %v187
      %189 = vst.msk [vmem:[#allocation4] sm:$0x1] %vm152, %v188
    $region33: #{_lambda_.11} parent=1 // pred_fallthru
      _
    // Predicated region
    $region34: #{_lambda_.11} parent=1 // pred_check
      _
    $region35: #{_lambda_.11} parent=1 // pred_check_branch
      %191 = sbr.rel (0) target = $region37
    $region36: #{_lambda_.11} parent=1 // pred_region
      %193 = vsyncadd [#allocation5], 0
      %s195 = sshll.u32 [#allocation4], 4
      %s196 = int_to_ptr.vmem [resolvable:$true] %s195
      %s197 = sshll.u32 %s6, 4
      %s198 = int_to_ptr.hbm [resolvable:$true] %s197
      %200 = dma.vmem_to_hbm [thread:$0]  %s196, 16, %s198, [#allocation5]
    $region37: #{_lambda_.11} parent=1 // pred_fallthru
      _
    // Predicated region
    $region38: #{_lambda_.11} parent=1 // pred_check
      _
    $region39: #{_lambda_.11} parent=1 // pred_check_branch
      %202 = sbr.rel (0) target = $region41
    $region40: #{_lambda_.11} parent=1 // pred_region
      %204 = dma.done [#allocation5], 16
    $region41: #{_lambda_.11} parent=1 // pred_fallthru
      _
    %205 = vsyncpa [#allocation5], 1

// kernel: _lambda_.9
$region0: #{_lambda_.9}
  #allocation0 [shape = 'u32[]', space=smem, size = 0x4, offset = 0x4, fixed_abs, tag = 'smem constant byte address 0x4 - core index']
  #allocation1 [shape = 'u32[72,128]{1,0:T(1,128)}', space=vmem, size = 0x9000, scoped, tag = 'internal scratch']
  %s0 = inlined_call_operand.vmem [shape: f32[2,4,32], index: 0, kind: input, shape index: {}]
  %s1 = inlined_call_operand.vmem [shape: f32[2,1,4], index: 1, kind: input, shape index: {}]
  %s2 = inlined_call_operand.vmem [shape: f32[1,32], index: 2, kind: input, shape index: {}]
  %s3 = inlined_call_operand.vmem [shape: f32[1,32], index: 3, kind: input, shape index: {}]
  %s4 = inlined_call_operand.vmem [shape: f32[32,96], index: 4, kind: input, shape index: {}]
  %s5 = inlined_call_operand.vmem [shape: f32[1,96], index: 5, kind: input, shape index: {}]
  %s6 = inlined_call_operand.vmem [shape: f32[32,32], index: 6, kind: input, shape index: {}]
  %s7 = inlined_call_operand.vmem [shape: f32[1,32], index: 7, kind: input, shape index: {}]
  %s8 = inlined_call_operand.vmem [shape: f32[1,32], index: 8, kind: input, shape index: {}]
  %s9 = inlined_call_operand.vmem [shape: f32[1,32], index: 9, kind: input, shape index: {}]
  %s10 = inlined_call_operand.vmem [shape: f32[32,48], index: 10, kind: input, shape index: {}]
  %s11 = inlined_call_operand.vmem [shape: f32[1,48], index: 11, kind: input, shape index: {}]
  %s12 = inlined_call_operand.vmem [shape: f32[48,32], index: 12, kind: input, shape index: {}]
  %s13 = inlined_call_operand.vmem [shape: f32[1,32], index: 13, kind: input, shape index: {}]
  %s14 = inlined_call_operand.vmem [shape: f32[2,4,32], index: 14, kind: output, shape index: {}]
  %s15 = sld [smem:[#allocation0]]
  $region89: #{_lambda_.9} parent=0
    _
  %s17 = ssub.s32 1, %s15
  %s18 = scalar_select 0, %s17, %s15
  loop: start=0, step=1, limit=4
  $region2: #{_lambda_.9} parent=0 // loop_pre_header
    _
  $region3: #{_lambda_.9} parent=0 // loop_header
    %s20 = sphi 0, %s24
    %p21 = scmp.ge.s32.totalorder %s20, 4
    %s30 = sphi 0, %s32
    %s33 = sphi 0, %s30
    %s34 = sphi 0, %s33
    %s50 = sphi 0, %s34
    %s56 = sphi 0, %s58
    %s59 = sphi 0, %s56
    %s60 = sphi 0, %s59
    %s76 = sphi 0, %s60
    %s80 = sphi 0, %s80
    %s82 = sphi 0, %s80
    %s83 = sphi 0, %s82
    %s97 = sphi 0, %s83
    %s101 = sphi 0, %s101
    %s103 = sphi 0, %s101
    %s104 = sphi 0, %s103
    %s118 = sphi 0, %s104
    %s122 = sphi 0, %s122
    %s124 = sphi 0, %s122
    %s125 = sphi 0, %s124
    %s139 = sphi 0, %s125
    %s143 = sphi 0, %s143
    %s145 = sphi 0, %s143
    %s146 = sphi 0, %s145
    %s160 = sphi 0, %s146
    %s164 = sphi 0, %s164
    %s166 = sphi 0, %s164
    %s167 = sphi 0, %s166
    %s181 = sphi 0, %s167
    %s185 = sphi 0, %s185
    %s187 = sphi 0, %s185
    %s188 = sphi 0, %s187
    %s202 = sphi 0, %s188
    %s206 = sphi 0, %s206
    %s208 = sphi 0, %s206
    %s209 = sphi 0, %s208
    %s223 = sphi 0, %s209
    %s227 = sphi 0, %s227
    %s229 = sphi 0, %s227
    %s230 = sphi 0, %s229
    %s244 = sphi 0, %s230
    %s248 = sphi 0, %s248
    %s250 = sphi 0, %s248
    %s251 = sphi 0, %s250
    %s265 = sphi 0, %s251
    %s269 = sphi 0, %s269
    %s271 = sphi 0, %s269
    %s272 = sphi 0, %s271
    %s286 = sphi 0, %s272
    %s290 = sphi 0, %s290
    %s292 = sphi 0, %s290
    %s293 = sphi 0, %s292
    %s307 = sphi 0, %s293
    %s311 = sphi 0, %s311
    %s313 = sphi 0, %s311
    %s314 = sphi 0, %s313
    %s328 = sphi 0, %s314
    %s334 = sphi 0, %s336
    %s337 = sphi 0, %s334
    %s338 = sphi 0, %s337
    %s354 = sphi 0, %s338
  $region4: #{_lambda_.9} parent=0 // loop_header_branch
    %23 = sbr.rel (%p21) target = $region8
  $region5: #{_lambda_.9} parent=0 // loop_body
    %s25 = ssub.s32 %s20, 1
    %s26 = ssub.s32 %s20, 2
    %s27 = sadd.s32 %s20, 1
    %s28 = ssub.s32 %s20, %s27
    %p29 = scmp.eq.s32.totalorder %s28, 0
    %s31 = sadd.s32 %s30, 1
    %s32 = scalar_select %p29, %s30, %s31
    %p35 = pneg %p29
    %p36 = scmp.eq.s32.totalorder %s20, 1
    %p37 = por %p35, %p36
    %p38 = scmp.ne.s32.totalorder %s30, %s33
    %p39 = scmp.eq.s32.totalorder %s20, 0
    %p40 = por %p38, %p39
    %p41 = scmp.ne.s32.totalorder %s30, %s33
    %p42 = scmp.eq.s32.totalorder %s25, 1
    %p43 = por %p41, %p42
    %p44 = scmp.ne.s32.totalorder %s33, %s34
    %p45 = scmp.eq.s32.totalorder %s25, 0
    %p46 = por %p44, %p45
    %p47 = scmp.ne.s32.totalorder %s33, %s34
    %p48 = scmp.eq.s32.totalorder %s26, 1
    %p49 = por %p47, %p48
    %p51 = scmp.ne.s32.totalorder %s34, %s50
    %p52 = scmp.eq.s32.totalorder %s26, 0
    %p53 = por %p51, %p52
    %s54 = ssub.s32 %s20, %s27
    %p55 = scmp.eq.s32.totalorder %s54, 0
    %s57 = sadd.s32 %s56, 1
    %s58 = scalar_select %p55, %s56, %s57
    %p61 = pneg %p55
    %p62 = scmp.eq.s32.totalorder %s20, 1
    %p63 = por %p61, %p62
    %p64 = scmp.ne.s32.totalorder %s56, %s59
    %p65 = scmp.eq.s32.totalorder %s20, 0
    %p66 = por %p64, %p65
    %p67 = scmp.ne.s32.totalorder %s56, %s59
    %p68 = scmp.eq.s32.totalorder %s25, 1
    %p69 = por %p67, %p68
    %p70 = scmp.ne.s32.totalorder %s59, %s60
    %p71 = scmp.eq.s32.totalorder %s25, 0
    %p72 = por %p70, %p71
    %p73 = scmp.ne.s32.totalorder %s59, %s60
    %p74 = scmp.eq.s32.totalorder %s26, 1
    %p75 = por %p73, %p74
    %p77 = scmp.ne.s32.totalorder %s60, %s76
    %p78 = scmp.eq.s32.totalorder %s26, 0
    %p79 = por %p77, %p78
    %s81 = sadd.s32 %s80, 1
    %p84 = scmp.eq.s32.totalorder %s20, 1
    %p85 = scmp.ne.s32.totalorder %s80, %s82
    %p86 = scmp.eq.s32.totalorder %s20, 0
    %p87 = por %p85, %p86
    %p88 = scmp.ne.s32.totalorder %s80, %s82
    %p89 = scmp.eq.s32.totalorder %s25, 1
    %p90 = por %p88, %p89
    %p91 = scmp.ne.s32.totalorder %s82, %s83
    %p92 = scmp.eq.s32.totalorder %s25, 0
    %p93 = por %p91, %p92
    %p94 = scmp.ne.s32.totalorder %s82, %s83
    %p95 = scmp.eq.s32.totalorder %s26, 1
    %p96 = por %p94, %p95
    %p98 = scmp.ne.s32.totalorder %s83, %s97
    %p99 = scmp.eq.s32.totalorder %s26, 0
    %p100 = por %p98, %p99
    %s102 = sadd.s32 %s101, 1
    %p105 = scmp.eq.s32.totalorder %s20, 1
    %p106 = scmp.ne.s32.totalorder %s101, %s103
    %p107 = scmp.eq.s32.totalorder %s20, 0
    %p108 = por %p106, %p107
    %p109 = scmp.ne.s32.totalorder %s101, %s103
    %p110 = scmp.eq.s32.totalorder %s25, 1
    %p111 = por %p109, %p110
    %p112 = scmp.ne.s32.totalorder %s103, %s104
    %p113 = scmp.eq.s32.totalorder %s25, 0
    %p114 = por %p112, %p113
    %p115 = scmp.ne.s32.totalorder %s103, %s104
    %p116 = scmp.eq.s32.totalorder %s26, 1
    %p117 = por %p115, %p116
    %p119 = scmp.ne.s32.totalorder %s104, %s118
    %p120 = scmp.eq.s32.totalorder %s26, 0
    %p121 = por %p119, %p120
    %s123 = sadd.s32 %s122, 1
    %p126 = scmp.eq.s32.totalorder %s20, 1
    %p127 = scmp.ne.s32.totalorder %s122, %s124
    %p128 = scmp.eq.s32.totalorder %s20, 0
    %p129 = por %p127, %p128
    %p130 = scmp.ne.s32.totalorder %s122, %s124
    %p131 = scmp.eq.s32.totalorder %s25, 1
    %p132 = por %p130, %p131
    %p133 = scmp.ne.s32.totalorder %s124, %s125
    %p134 = scmp.eq.s32.totalorder %s25, 0
    %p135 = por %p133, %p134
    %p136 = scmp.ne.s32.totalorder %s124, %s125
    %p137 = scmp.eq.s32.totalorder %s26, 1
    %p138 = por %p136, %p137
    %p140 = scmp.ne.s32.totalorder %s125, %s139
    %p141 = scmp.eq.s32.totalorder %s26, 0
    %p142 = por %p140, %p141
    %s144 = sadd.s32 %s143, 1
    %p147 = scmp.eq.s32.totalorder %s20, 1
    %p148 = scmp.ne.s32.totalorder %s143, %s145
    %p149 = scmp.eq.s32.totalorder %s20, 0
    %p150 = por %p148, %p149
    %p151 = scmp.ne.s32.totalorder %s143, %s145
    %p152 = scmp.eq.s32.totalorder %s25, 1
    %p153 = por %p151, %p152
    %p154 = scmp.ne.s32.totalorder %s145, %s146
    %p155 = scmp.eq.s32.totalorder %s25, 0
    %p156 = por %p154, %p155
    %p157 = scmp.ne.s32.totalorder %s145, %s146
    %p158 = scmp.eq.s32.totalorder %s26, 1
    %p159 = por %p157, %p158
    %p161 = scmp.ne.s32.totalorder %s146, %s160
    %p162 = scmp.eq.s32.totalorder %s26, 0
    %p163 = por %p161, %p162
    %s165 = sadd.s32 %s164, 1
    %p168 = scmp.eq.s32.totalorder %s20, 1
    %p169 = scmp.ne.s32.totalorder %s164, %s166
    %p170 = scmp.eq.s32.totalorder %s20, 0
    %p171 = por %p169, %p170
    %p172 = scmp.ne.s32.totalorder %s164, %s166
    %p173 = scmp.eq.s32.totalorder %s25, 1
    %p174 = por %p172, %p173
    %p175 = scmp.ne.s32.totalorder %s166, %s167
    %p176 = scmp.eq.s32.totalorder %s25, 0
    %p177 = por %p175, %p176
    %p178 = scmp.ne.s32.totalorder %s166, %s167
    %p179 = scmp.eq.s32.totalorder %s26, 1
    %p180 = por %p178, %p179
    %p182 = scmp.ne.s32.totalorder %s167, %s181
    %p183 = scmp.eq.s32.totalorder %s26, 0
    %p184 = por %p182, %p183
    %s186 = sadd.s32 %s185, 1
    %p189 = scmp.eq.s32.totalorder %s20, 1
    %p190 = scmp.ne.s32.totalorder %s185, %s187
    %p191 = scmp.eq.s32.totalorder %s20, 0
    %p192 = por %p190, %p191
    %p193 = scmp.ne.s32.totalorder %s185, %s187
    %p194 = scmp.eq.s32.totalorder %s25, 1
    %p195 = por %p193, %p194
    %p196 = scmp.ne.s32.totalorder %s187, %s188
    %p197 = scmp.eq.s32.totalorder %s25, 0
    %p198 = por %p196, %p197
    %p199 = scmp.ne.s32.totalorder %s187, %s188
    %p200 = scmp.eq.s32.totalorder %s26, 1
    %p201 = por %p199, %p200
    %p203 = scmp.ne.s32.totalorder %s188, %s202
    %p204 = scmp.eq.s32.totalorder %s26, 0
    %p205 = por %p203, %p204
    %s207 = sadd.s32 %s206, 1
    %p210 = scmp.eq.s32.totalorder %s20, 1
    %p211 = scmp.ne.s32.totalorder %s206, %s208
    %p212 = scmp.eq.s32.totalorder %s20, 0
    %p213 = por %p211, %p212
    %p214 = scmp.ne.s32.totalorder %s206, %s208
    %p215 = scmp.eq.s32.totalorder %s25, 1
    %p216 = por %p214, %p215
    %p217 = scmp.ne.s32.totalorder %s208, %s209
    %p218 = scmp.eq.s32.totalorder %s25, 0
    %p219 = por %p217, %p218
    %p220 = scmp.ne.s32.totalorder %s208, %s209
    %p221 = scmp.eq.s32.totalorder %s26, 1
    %p222 = por %p220, %p221
    %p224 = scmp.ne.s32.totalorder %s209, %s223
    %p225 = scmp.eq.s32.totalorder %s26, 0
    %p226 = por %p224, %p225
    %s228 = sadd.s32 %s227, 1
    %p231 = scmp.eq.s32.totalorder %s20, 1
    %p232 = scmp.ne.s32.totalorder %s227, %s229
    %p233 = scmp.eq.s32.totalorder %s20, 0
    %p234 = por %p232, %p233
    %p235 = scmp.ne.s32.totalorder %s227, %s229
    %p236 = scmp.eq.s32.totalorder %s25, 1
    %p237 = por %p235, %p236
    %p238 = scmp.ne.s32.totalorder %s229, %s230
    %p239 = scmp.eq.s32.totalorder %s25, 0
    %p240 = por %p238, %p239
    %p241 = scmp.ne.s32.totalorder %s229, %s230
    %p242 = scmp.eq.s32.totalorder %s26, 1
    %p243 = por %p241, %p242
    %p245 = scmp.ne.s32.totalorder %s230, %s244
    %p246 = scmp.eq.s32.totalorder %s26, 0
    %p247 = por %p245, %p246
    %s249 = sadd.s32 %s248, 1
    %p252 = scmp.eq.s32.totalorder %s20, 1
    %p253 = scmp.ne.s32.totalorder %s248, %s250
    %p254 = scmp.eq.s32.totalorder %s20, 0
    %p255 = por %p253, %p254
    %p256 = scmp.ne.s32.totalorder %s248, %s250
    %p257 = scmp.eq.s32.totalorder %s25, 1
    %p258 = por %p256, %p257
    %p259 = scmp.ne.s32.totalorder %s250, %s251
    %p260 = scmp.eq.s32.totalorder %s25, 0
    %p261 = por %p259, %p260
    %p262 = scmp.ne.s32.totalorder %s250, %s251
    %p263 = scmp.eq.s32.totalorder %s26, 1
    %p264 = por %p262, %p263
    %p266 = scmp.ne.s32.totalorder %s251, %s265
    %p267 = scmp.eq.s32.totalorder %s26, 0
    %p268 = por %p266, %p267
    %s270 = sadd.s32 %s269, 1
    %p273 = scmp.eq.s32.totalorder %s20, 1
    %p274 = scmp.ne.s32.totalorder %s269, %s271
    %p275 = scmp.eq.s32.totalorder %s20, 0
    %p276 = por %p274, %p275
    %p277 = scmp.ne.s32.totalorder %s269, %s271
    %p278 = scmp.eq.s32.totalorder %s25, 1
    %p279 = por %p277, %p278
    %p280 = scmp.ne.s32.totalorder %s271, %s272
    %p281 = scmp.eq.s32.totalorder %s25, 0
    %p282 = por %p280, %p281
    %p283 = scmp.ne.s32.totalorder %s271, %s272
    %p284 = scmp.eq.s32.totalorder %s26, 1
    %p285 = por %p283, %p284
    %p287 = scmp.ne.s32.totalorder %s272, %s286
    %p288 = scmp.eq.s32.totalorder %s26, 0
    %p289 = por %p287, %p288
    %s291 = sadd.s32 %s290, 1
    %p294 = scmp.eq.s32.totalorder %s20, 1
    %p295 = scmp.ne.s32.totalorder %s290, %s292
    %p296 = scmp.eq.s32.totalorder %s20, 0
    %p297 = por %p295, %p296
    %p298 = scmp.ne.s32.totalorder %s290, %s292
    %p299 = scmp.eq.s32.totalorder %s25, 1
    %p300 = por %p298, %p299
    %p301 = scmp.ne.s32.totalorder %s292, %s293
    %p302 = scmp.eq.s32.totalorder %s25, 0
    %p303 = por %p301, %p302
    %p304 = scmp.ne.s32.totalorder %s292, %s293
    %p305 = scmp.eq.s32.totalorder %s26, 1
    %p306 = por %p304, %p305
    %p308 = scmp.ne.s32.totalorder %s293, %s307
    %p309 = scmp.eq.s32.totalorder %s26, 0
    %p310 = por %p308, %p309
    %s312 = sadd.s32 %s311, 1
    %p315 = scmp.eq.s32.totalorder %s20, 1
    %p316 = scmp.ne.s32.totalorder %s311, %s313
    %p317 = scmp.eq.s32.totalorder %s20, 0
    %p318 = por %p316, %p317
    %p319 = scmp.ne.s32.totalorder %s311, %s313
    %p320 = scmp.eq.s32.totalorder %s25, 1
    %p321 = por %p319, %p320
    %p322 = scmp.ne.s32.totalorder %s313, %s314
    %p323 = scmp.eq.s32.totalorder %s25, 0
    %p324 = por %p322, %p323
    %p325 = scmp.ne.s32.totalorder %s313, %s314
    %p326 = scmp.eq.s32.totalorder %s26, 1
    %p327 = por %p325, %p326
    %p329 = scmp.ne.s32.totalorder %s314, %s328
    %p330 = scmp.eq.s32.totalorder %s26, 0
    %p331 = por %p329, %p330
    %s332 = ssub.s32 %s20, %s27
    %p333 = scmp.eq.s32.totalorder %s332, 0
    %s335 = sadd.s32 %s334, 1
    %s336 = scalar_select %p333, %s334, %s335
    %p339 = pneg %p333
    %p340 = scmp.eq.s32.totalorder %s20, 1
    %p341 = por %p339, %p340
    %p342 = scmp.ne.s32.totalorder %s334, %s337
    %p343 = scmp.eq.s32.totalorder %s20, 0
    %p344 = por %p342, %p343
    %p345 = scmp.ne.s32.totalorder %s334, %s337
    %p346 = scmp.eq.s32.totalorder %s25, 1
    %p347 = por %p345, %p346
    %p348 = scmp.ne.s32.totalorder %s337, %s338
    %p349 = scmp.eq.s32.totalorder %s25, 0
    %p350 = por %p348, %p349
    %p351 = scmp.ne.s32.totalorder %s337, %s338
    %p352 = scmp.eq.s32.totalorder %s26, 1
    %p353 = por %p351, %p352
    %p355 = scmp.ne.s32.totalorder %s338, %s354
    %p356 = scmp.eq.s32.totalorder %s26, 0
    %p357 = por %p355, %p356
    %p358 = scmp.le.s32.totalorder 1, %s20
    %p359 = scmp.lt.s32.totalorder %s20, 3
    %p360 = pnand %p358, %p359
    %p361 = pneg %p360
    // Predicated region
    $region9: #{_lambda_.9} parent=5 // pred_check
      _
    $region10: #{_lambda_.9} parent=5 // pred_check_branch
      %363 = sbr.rel (%p360) target = $region12
    $region11: #{_lambda_.9} parent=5 // pred_region
      %s364 = ssub.s32 %s20, 1
      // Predicated region
      $region13: #{_lambda_.9} parent=11 // pred_check
        %p365 = pneg %p93
      $region14: #{_lambda_.9} parent=11 // pred_check_branch
        %367 = sbr.rel (%p365) target = $region16
      $region15: #{_lambda_.9} parent=11 // pred_region
        _
      $region16: #{_lambda_.9} parent=11 // pred_fallthru
        _
      // Predicated region
      $region17: #{_lambda_.9} parent=11 // pred_check
        %p368 = pneg %p114
      $region18: #{_lambda_.9} parent=11 // pred_check_branch
        %370 = sbr.rel (%p368) target = $region20
      $region19: #{_lambda_.9} parent=11 // pred_region
        _
      $region20: #{_lambda_.9} parent=11 // pred_fallthru
        _
      // Predicated region
      $region21: #{_lambda_.9} parent=11 // pred_check
        %p371 = pneg %p135
      $region22: #{_lambda_.9} parent=11 // pred_check_branch
        %373 = sbr.rel (%p371) target = $region24
      $region23: #{_lambda_.9} parent=11 // pred_region
        _
      $region24: #{_lambda_.9} parent=11 // pred_fallthru
        _
      // Predicated region
      $region25: #{_lambda_.9} parent=11 // pred_check
        %p374 = pneg %p156
      $region26: #{_lambda_.9} parent=11 // pred_check_branch
        %376 = sbr.rel (%p374) target = $region28
      $region27: #{_lambda_.9} parent=11 // pred_region
        _
      $region28: #{_lambda_.9} parent=11 // pred_fallthru
        _
      // Predicated region
      $region29: #{_lambda_.9} parent=11 // pred_check
        %p377 = pneg %p177
      $region30: #{_lambda_.9} parent=11 // pred_check_branch
        %379 = sbr.rel (%p377) target = $region32
      $region31: #{_lambda_.9} parent=11 // pred_region
        _
      $region32: #{_lambda_.9} parent=11 // pred_fallthru
        _
      // Predicated region
      $region33: #{_lambda_.9} parent=11 // pred_check
        %p380 = pneg %p198
      $region34: #{_lambda_.9} parent=11 // pred_check_branch
        %382 = sbr.rel (%p380) target = $region36
      $region35: #{_lambda_.9} parent=11 // pred_region
        _
      $region36: #{_lambda_.9} parent=11 // pred_fallthru
        _
      // Predicated region
      $region37: #{_lambda_.9} parent=11 // pred_check
        %p383 = pneg %p219
      $region38: #{_lambda_.9} parent=11 // pred_check_branch
        %385 = sbr.rel (%p383) target = $region40
      $region39: #{_lambda_.9} parent=11 // pred_region
        _
      $region40: #{_lambda_.9} parent=11 // pred_fallthru
        _
      // Predicated region
      $region41: #{_lambda_.9} parent=11 // pred_check
        %p386 = pneg %p240
      $region42: #{_lambda_.9} parent=11 // pred_check_branch
        %388 = sbr.rel (%p386) target = $region44
      $region43: #{_lambda_.9} parent=11 // pred_region
        _
      $region44: #{_lambda_.9} parent=11 // pred_fallthru
        _
      // Predicated region
      $region45: #{_lambda_.9} parent=11 // pred_check
        %p389 = pneg %p261
      $region46: #{_lambda_.9} parent=11 // pred_check_branch
        %391 = sbr.rel (%p389) target = $region48
      $region47: #{_lambda_.9} parent=11 // pred_region
        _
      $region48: #{_lambda_.9} parent=11 // pred_fallthru
        _
      // Predicated region
      $region49: #{_lambda_.9} parent=11 // pred_check
        %p392 = pneg %p282
      $region50: #{_lambda_.9} parent=11 // pred_check_branch
        %394 = sbr.rel (%p392) target = $region52
      $region51: #{_lambda_.9} parent=11 // pred_region
        _
      $region52: #{_lambda_.9} parent=11 // pred_fallthru
        _
      // Predicated region
      $region53: #{_lambda_.9} parent=11 // pred_check
        %p395 = pneg %p303
      $region54: #{_lambda_.9} parent=11 // pred_check_branch
        %397 = sbr.rel (%p395) target = $region56
      $region55: #{_lambda_.9} parent=11 // pred_region
        _
      $region56: #{_lambda_.9} parent=11 // pred_fallthru
        _
      // Predicated region
      $region57: #{_lambda_.9} parent=11 // pred_check
        %p398 = pneg %p324
      $region58: #{_lambda_.9} parent=11 // pred_check_branch
        %400 = sbr.rel (%p398) target = $region60
      $region59: #{_lambda_.9} parent=11 // pred_region
        _
      $region60: #{_lambda_.9} parent=11 // pred_fallthru
        _
    $region12: #{_lambda_.9} parent=5 // pred_fallthru
      _
    %p401 = scmp.lt.s32.totalorder %s20, 2
    // Predicated region
    $region61: #{_lambda_.9} parent=5 // pred_check
      %p402 = pneg %p401
    $region62: #{_lambda_.9} parent=5 // pred_check_branch
      %404 = sbr.rel (%p402) target = $region64
    $region63: #{_lambda_.9} parent=5 // pred_region
      // Predicated region
      $region65: #{_lambda_.9} parent=63 // pred_check
        %p405 = pneg %p40
      $region66: #{_lambda_.9} parent=63 // pred_check_branch
        %407 = sbr.rel (%p405) target = $region68
      $region67: #{_lambda_.9} parent=63 // pred_region
        %p408 = scmp.lt.s32.totalorder %s20, 1
        %s409 = scalar_select %p408, %s20, 1
        %s410 = smul.addr %s409, 4
        %s411 = scalar_lea.vmem %s0, %s410
      $region68: #{_lambda_.9} parent=63 // pred_fallthru
        _
      // Predicated region
      $region69: #{_lambda_.9} parent=63 // pred_check
        %p412 = pneg %p66
      $region70: #{_lambda_.9} parent=63 // pred_check_branch
        %414 = sbr.rel (%p412) target = $region72
      $region71: #{_lambda_.9} parent=63 // pred_region
        %p415 = scmp.lt.s32.totalorder %s20, 1
        %s416 = scalar_select %p415, %s20, 1
        %s417 = scalar_lea.vmem %s1, %s416
      $region72: #{_lambda_.9} parent=63 // pred_fallthru
        _
    $region64: #{_lambda_.9} parent=5 // pred_fallthru
      _
    %p418 = scmp.le.s32.totalorder 1, %s20
    %p419 = scmp.lt.s32.totalorder %s20, 3
    %p420 = pnand %p418, %p419
    %p421 = pneg %p420
    // Predicated region
    $region73: #{_lambda_.9} parent=5 // pred_check
      _
    $region74: #{_lambda_.9} parent=5 // pred_check_branch
      %423 = sbr.rel (%p420) target = $region76
    $region75: #{_lambda_.9} parent=5 // pred_region
      %s424 = ssub.s32 %s20, 1
      %p425 = scmp.lt.s32.totalorder %s25, 1
      %s426 = scalar_select %p425, %s25, 1
      %s427 = smul.addr %s426, 4
      %s428 = scalar_lea.vmem %s0, %s427
      %p429 = pneg %p46
      %p430 = pneg %p43
      %p431 = scmp.lt.s32.totalorder %s25, 1
      %s432 = scalar_select %p431, %s25, 1
      %s433 = scalar_lea.vmem %s1, %s432
      %p434 = pneg %p72
      %p435 = pneg %p69
      %p436 = pneg %p93
      %p437 = pneg %p90
      %p438 = pneg %p114
      %p439 = pneg %p111
      %p440 = pneg %p135
      %p441 = pneg %p132
      %p442 = pneg %p156
      %p443 = pneg %p153
      %p444 = pneg %p177
      %p445 = pneg %p174
      %p446 = pneg %p198
      %p447 = pneg %p195
      %p448 = pneg %p219
      %p449 = pneg %p216
      %p450 = pneg %p240
      %p451 = pneg %p237
      %p452 = pneg %p261
      %p453 = pneg %p258
      %p454 = pneg %p282
      %p455 = pneg %p279
      %p456 = pneg %p303
      %p457 = pneg %p300
      %p458 = pneg %p324
      %p459 = pneg %p321
      %p460 = pneg %p350
      %p461 = pneg %p347
      %p462 = scmp.lt.s32.totalorder %s25, 1
      %s463 = scalar_select %p462, %s25, 1
      %s464 = smul.addr %s463, 4
      %s465 = scalar_lea.vmem %s14, %s464
      %p466 = scmp.lt.s32.totalorder %s25, 1
      %s467 = scalar_select %p466, %s25, 1
      %s468 = smul.addr %s467, 4
      %s469 = scalar_lea.vmem %s0, %s468
      %p470 = scmp.lt.s32.totalorder %s25, 1
      %s471 = scalar_select %p470, %s25, 1
      %s472 = scalar_lea.vmem %s1, %s471
      %p473 = scmp.lt.s32.totalorder %s25, 1
      %s474 = scalar_select %p473, %s25, 1
      %s475 = smul.addr %s474, 4
      %s476 = scalar_lea.vmem %s14, %s475
      %v477 = vld [vmem:[%s469] sm:$0xf]
      %v478 = vld [vmem:[%s472] sm:$0x1]
      %v479 = vld [vmem:[%s2] sm:$0x1]
      %v480 = vld [vmem:[%s3] sm:$0x1]
      %vm481 = vcmask 257024
      %v482 = vsel %vm481, %v477, 0.0
      %483 = vadd.xlane.f32.xlu0 %v482
      %v484 = vpop.xlane.xlu0 %483
      %v485 = vrcp.pop 32.0
      %v486 = vmul.f32 32.0, %v485
      %v487 = vsub.f32 1.0, %v486
      %v488 = vmul.f32 %v485, %v487
      %v489 = vadd.f32 %v485, %v488
      %vm490 = vweird.f32 %v485
      %v491 = vsel %vm490, %v485, %v489
      %v492 = vmul.f32 %v484, %v491
      %v493 = vsub.f32 %v477, %v492
      %v494 = vmul.f32 %v493, %v493
      %v495 = vsel %vm481, %v494, 0.0
      %496 = vadd.xlane.f32.xlu0 %v495
      %v497 = vpop.xlane.xlu0 %496
      %v498 = vmul.f32 %v497, %v491
      %v499 = vadd.f32 %v498, 1e-12
      %v500 = vrsqrt.pop %v499
      %v501 = vmul.f32 %v500, %v499
      %v502 = vmul.f32 %v501, %v500
      %v503 = vmul.f32 0.5, %v502
      %v504 = vsub.f32 1.5, %v503
      %v505 = vmul.f32 %v500, %v504
      %vm506 = vweird.f32 %v499
      %vm507 = vweird.f32 %v500
      %vm508 = vmor %vm506, %vm507
      %v509 = vsel %vm508, %v500, %v505
      %v510 = vmul.f32 %v493, %v509
      %v512 = vperm.slane %v479, 0
      %v514 = vmul.f32 %v510, %v512
      %v516 = vperm.slane %v480, 0
      %v518 = vadd.f32 %v514, %v516
      %v519 = vld [vmem:[%s4] sm:$0xff]
      %v520 = vld [vmem:[%s4 + $0x8] sm:$0xff]
      %v521 = vld [vmem:[%s4 + $0x10] sm:$0xff]
      %v522 = vld [vmem:[%s4 + $0x18] sm:$0xff]
      %v523 = vld [vmem:[%s5] sm:$0x1]
      %v525 = vperm.slane %v523, 0
      %vm527 = vcmask 261120
      %v529 = vsel %vm527, %v518, 0
      %531 = vmatpush.msra.mxu0 0.0
      %532 = vmatpush.msra.mxu0 0.0
      %533 = vmatpush.msra.mxu0 0.0
      %534 = vmatpush.msra.mxu0 0.0
      %535 = vmatpush.msra.mxu0 0.0
      %536 = vmatpush.msra.mxu0 0.0
      %537 = vmatpush.msra.mxu0 0.0
      %538 = vmatpush.msra.mxu0 0.0
      %539 = vmatpush.msra.mxu0 0.0
      %540 = vmatpush.msra.mxu0 0.0
      %541 = vmatpush.msra.mxu0 0.0
      %542 = vmatpush.msra.mxu0 0.0
      %543 = vmatpush.msra.mxu0 %v522
      %544 = vmatpush.msra.mxu0 %v521
      %545 = vmatpush.msra.mxu0 %v520
      %546 = vmatpush.msra.mxu0 %v519
      %547 = vmatmul.f32.gmra.mxu0 %v529
      %v548 = vpop.f32.mrf.mxu0
      %v549 = vadd.f32 %v525, %v548
      %550 = vdwg.mxu0
      %v551 = vsub.f32 %v478, 1.0
      %v552 = vmul.f32 %v551, 1e+30
      %v553 = vmul.f32 %v549, 0.35355338
      %v555 = vperm.slane %v552, 0
      %558 = vrot.lane.b32.xlu0 %v549, 96
      %v559 = vpop.permute.xlu0 %558
      %vm560 = vcmask 64512
      %v562 = vsel %vm560, %v553, 0
      %v564 = vsel %vm560, %v559, 0
      %566 = vmatpush.xpose.msra.mxu0 0.0
      %567 = vmatpush.xpose.msra.mxu0 0.0
      %568 = vmatpush.xpose.msra.mxu0 0.0
      %569 = vmatpush.xpose.msra.mxu0 0.0
      %570 = vmatpush.xpose.msra.mxu0 0.0
      %571 = vmatpush.xpose.msra.mxu0 0.0
      %572 = vmatpush.xpose.msra.mxu0 0.0
      %573 = vmatpush.xpose.msra.mxu0 0.0
      %574 = vmatpush.xpose.msra.mxu0 0.0
      %575 = vmatpush.xpose.msra.mxu0 0.0
      %576 = vmatpush.xpose.msra.mxu0 0.0
      %577 = vmatpush.xpose.msra.mxu0 0.0
      %578 = vmatpush.xpose.msra.mxu0 0.0
      %579 = vmatpush.xpose.msra.mxu0 0.0
      %580 = vmatpush.xpose.msra.mxu0 0.0
      %581 = vmatpush.xpose.msra.mxu0 %v564
      %582 = vmatmul.f32.gmra.mxu0 %v562
      %v583 = vpop.f32.mrf.mxu0
      %v584 = vadd.f32 %v555, %v583
      %585 = vdwg.mxu0
      %vm586 = vcmask 27648
      %v587 = vsel %vm586, %v584, -inf
      %588 = vmax.xlane.f32.xlu0 %v587
      %v589 = vpop.xlane.xlu0 %588
      %v590 = vsub.f32 %v584, %v589
      %v591 = vmul.f32 %v590, 1.442695
      %v592 = vpow.pop %v591
      %v593 = vsel %vm586, %v592, 0.0
      %594 = vadd.xlane.f32.xlu0 %v593
      %v595 = vpop.xlane.xlu0 %594
      %v596 = vrcp.pop %v595
      %v597 = vmul.f32 %v592, %v596
      %v599 = vperm.slane %v478, 0
      %v601 = vmul.f32 %v597, %v599
      %602 = vrot.lane.b32.xlu0 %v549, 64
      %v603 = vpop.permute.xlu0 %602
      %vm604 = vcmask 31744
      %v606 = vsel %vm604, %v601, 0
      %vm608 = vcmask 1043456
      %v609 = vsel %vm608, %v603, 0
      %611 = vmatpush.msra.mxu0 0.0
      %612 = vmatpush.msra.mxu0 0.0
      %613 = vmatpush.msra.mxu0 0.0
      %614 = vmatpush.msra.mxu0 0.0
      %615 = vmatpush.msra.mxu0 0.0
      %616 = vmatpush.msra.mxu0 0.0
      %617 = vmatpush.msra.mxu0 0.0
      %618 = vmatpush.msra.mxu0 0.0
      %619 = vmatpush.msra.mxu0 0.0
      %620 = vmatpush.msra.mxu0 0.0
      %621 = vmatpush.msra.mxu0 0.0
      %622 = vmatpush.msra.mxu0 0.0
      %623 = vmatpush.msra.mxu0 0.0
      %624 = vmatpush.msra.mxu0 0.0
      %625 = vmatpush.msra.mxu0 0.0
      %626 = vmatpush.msra.mxu0 %v609
      %627 = vmatmul.f32.gmra.mxu0 %v606
      %v628 = vpop.f32.mrf.mxu0
      %v629 = vadd.f32 0.0, %v628
      %630 = vdwg.mxu0
      %631 = vrot.lane.b32.xlu0 %v553, 120
      %v632 = vpop.permute.xlu0 %631
      %633 = vrot.lane.b32.xlu0 %v549, 88
      %v634 = vpop.permute.xlu0 %633
      %v635 = vsel %vm560, %v632, 0
      %v637 = vsel %vm560, %v634, 0
      %639 = vmatpush.xpose.msra.mxu0 0.0
      %640 = vmatpush.xpose.msra.mxu0 0.0
      %641 = vmatpush.xpose.msra.mxu0 0.0
      %642 = vmatpush.xpose.msra.mxu0 0.0
      %643 = vmatpush.xpose.msra.mxu0 0.0
      %644 = vmatpush.xpose.msra.mxu0 0.0
      %645 = vmatpush.xpose.msra.mxu0 0.0
      %646 = vmatpush.xpose.msra.mxu0 0.0
      %647 = vmatpush.xpose.msra.mxu0 0.0
      %648 = vmatpush.xpose.msra.mxu0 0.0
      %649 = vmatpush.xpose.msra.mxu0 0.0
      %650 = vmatpush.xpose.msra.mxu0 0.0
      %651 = vmatpush.xpose.msra.mxu0 0.0
      %652 = vmatpush.xpose.msra.mxu0 0.0
      %653 = vmatpush.xpose.msra.mxu0 0.0
      %654 = vmatpush.xpose.msra.mxu0 %v637
      %655 = vmatmul.f32.gmra.mxu0 %v635
      %v656 = vpop.f32.mrf.mxu0
      %v657 = vadd.f32 %v555, %v656
      %658 = vdwg.mxu0
      %v659 = vsel %vm586, %v657, -inf
      %660 = vmax.xlane.f32.xlu0 %v659
      %v661 = vpop.xlane.xlu0 %660
      %v662 = vsub.f32 %v657, %v661
      %v663 = vmul.f32 %v662, 1.442695
      %v664 = vpow.pop %v663
      %v665 = vsel %vm586, %v664, 0.0
      %666 = vadd.xlane.f32.xlu0 %v665
      %v667 = vpop.xlane.xlu0 %666
      %v668 = vrcp.pop %v667
      %v669 = vmul.f32 %v664, %v668
      %v670 = vmul.f32 %v669, %v599
      %671 = vrot.lane.b32.xlu0 %v549, 56
      %v672 = vpop.permute.xlu0 %671
      %v674 = vsel %vm604, %v670, 0
      %v676 = vsel %vm608, %v672, 0
      %678 = vmatpush.msra.mxu0 0.0
      %679 = vmatpush.msra.mxu0 0.0
      %680 = vmatpush.msra.mxu0 0.0
      %681 = vmatpush.msra.mxu0 0.0
      %682 = vmatpush.msra.mxu0 0.0
      %683 = vmatpush.msra.mxu0 0.0
      %684 = vmatpush.msra.mxu0 0.0
      %685 = vmatpush.msra.mxu0 0.0
      %686 = vmatpush.msra.mxu0 0.0
      %687 = vmatpush.msra.mxu0 0.0
      %688 = vmatpush.msra.mxu0 0.0
      %689 = vmatpush.msra.mxu0 0.0
      %690 = vmatpush.msra.mxu0 0.0
      %691 = vmatpush.msra.mxu0 0.0
      %692 = vmatpush.msra.mxu0 0.0
      %693 = vmatpush.msra.mxu0 %v676
      %694 = vmatmul.f32.gmra.mxu0 %v674
      %v695 = vpop.f32.mrf.mxu0
      %v696 = vadd.f32 0.0, %v695
      %697 = vdwg.mxu0
      %698 = vrot.lane.b32.xlu0 %v553, 112
      %v699 = vpop.permute.xlu0 %698
      %700 = vrot.lane.b32.xlu0 %v549, 80
      %v701 = vpop.permute.xlu0 %700
      %v702 = vsel %vm560, %v699, 0
      %v704 = vsel %vm560, %v701, 0
      %706 = vmatpush.xpose.msra.mxu0 0.0
      %707 = vmatpush.xpose.msra.mxu0 0.0
      %708 = vmatpush.xpose.msra.mxu0 0.0
      %709 = vmatpush.xpose.msra.mxu0 0.0
      %710 = vmatpush.xpose.msra.mxu0 0.0
      %711 = vmatpush.xpose.msra.mxu0 0.0
      %712 = vmatpush.xpose.msra.mxu0 0.0
      %713 = vmatpush.xpose.msra.mxu0 0.0
      %714 = vmatpush.xpose.msra.mxu0 0.0
      %715 = vmatpush.xpose.msra.mxu0 0.0
      %716 = vmatpush.xpose.msra.mxu0 0.0
      %717 = vmatpush.xpose.msra.mxu0 0.0
      %718 = vmatpush.xpose.msra.mxu0 0.0
      %719 = vmatpush.xpose.msra.mxu0 0.0
      %720 = vmatpush.xpose.msra.mxu0 0.0
      %721 = vmatpush.xpose.msra.mxu0 %v704
      %722 = vmatmul.f32.gmra.mxu0 %v702
      %v723 = vpop.f32.mrf.mxu0
      %v724 = vadd.f32 %v555, %v723
      %725 = vdwg.mxu0
      %v726 = vsel %vm586, %v724, -inf
      %727 = vmax.xlane.f32.xlu0 %v726
      %v728 = vpop.xlane.xlu0 %727
      %v729 = vsub.f32 %v724, %v728
      %v730 = vmul.f32 %v729, 1.442695
      %v731 = vpow.pop %v730
      %v732 = vsel %vm586, %v731, 0.0
      %733 = vadd.xlane.f32.xlu0 %v732
      %v734 = vpop.xlane.xlu0 %733
      %v735 = vrcp.pop %v734
      %v736 = vmul.f32 %v731, %v735
      %v737 = vmul.f32 %v736, %v599
      %738 = vrot.lane.b32.xlu0 %v549, 48
      %v739 = vpop.permute.xlu0 %738
      %v741 = vsel %vm604, %v737, 0
      %v743 = vsel %vm608, %v739, 0
      %745 = vmatpush.msra.mxu0 0.0
      %746 = vmatpush.msra.mxu0 0.0
      %747 = vmatpush.msra.mxu0 0.0
      %748 = vmatpush.msra.mxu0 0.0
      %749 = vmatpush.msra.mxu0 0.0
      %750 = vmatpush.msra.mxu0 0.0
      %751 = vmatpush.msra.mxu0 0.0
      %752 = vmatpush.msra.mxu0 0.0
      %753 = vmatpush.msra.mxu0 0.0
      %754 = vmatpush.msra.mxu0 0.0
      %755 = vmatpush.msra.mxu0 0.0
      %756 = vmatpush.msra.mxu0 0.0
      %757 = vmatpush.msra.mxu0 0.0
      %758 = vmatpush.msra.mxu0 0.0
      %759 = vmatpush.msra.mxu0 0.0
      %760 = vmatpush.msra.mxu0 %v743
      %761 = vmatmul.f32.gmra.mxu0 %v741
      %v762 = vpop.f32.mrf.mxu0
      %v763 = vadd.f32 0.0, %v762
      %764 = vdwg.mxu0
      %765 = vrot.lane.b32.xlu0 %v553, 104
      %v766 = vpop.permute.xlu0 %765
      %767 = vrot.lane.b32.xlu0 %v549, 72
      %v768 = vpop.permute.xlu0 %767
      %v769 = vsel %vm560, %v766, 0
      %v771 = vsel %vm560, %v768, 0
      %773 = vmatpush.xpose.msra.mxu0 0.0
      %774 = vmatpush.xpose.msra.mxu0 0.0
      %775 = vmatpush.xpose.msra.mxu0 0.0
      %776 = vmatpush.xpose.msra.mxu0 0.0
      %777 = vmatpush.xpose.msra.mxu0 0.0
      %778 = vmatpush.xpose.msra.mxu0 0.0
      %779 = vmatpush.xpose.msra.mxu0 0.0
      %780 = vmatpush.xpose.msra.mxu0 0.0
      %781 = vmatpush.xpose.msra.mxu0 0.0
      %782 = vmatpush.xpose.msra.mxu0 0.0
      %783 = vmatpush.xpose.msra.mxu0 0.0
      %784 = vmatpush.xpose.msra.mxu0 0.0
      %785 = vmatpush.xpose.msra.mxu0 0.0
      %786 = vmatpush.xpose.msra.mxu0 0.0
      %787 = vmatpush.xpose.msra.mxu0 0.0
      %788 = vmatpush.xpose.msra.mxu0 %v771
      %789 = vmatmul.f32.gmra.mxu0 %v769
      %v790 = vpop.f32.mrf.mxu0
      %v791 = vadd.f32 %v555, %v790
      %792 = vdwg.mxu0
      %v793 = vsel %vm586, %v791, -inf
      %794 = vmax.xlane.f32.xlu0 %v793
      %v795 = vpop.xlane.xlu0 %794
      %v796 = vsub.f32 %v791, %v795
      %v797 = vmul.f32 %v796, 1.442695
      %v798 = vpow.pop %v797
      %v799 = vsel %vm586, %v798, 0.0
      %800 = vadd.xlane.f32.xlu0 %v799
      %v801 = vpop.xlane.xlu0 %800
      %v802 = vrcp.pop %v801
      %v803 = vmul.f32 %v798, %v802
      %v804 = vmul.f32 %v803, %v599
      %805 = vrot.lane.b32.xlu0 %v549, 40
      %v806 = vpop.permute.xlu0 %805
      %v808 = vsel %vm604, %v804, 0
      %v810 = vsel %vm608, %v806, 0
      %812 = vmatpush.msra.mxu0 0.0
      %813 = vmatpush.msra.mxu0 0.0
      %814 = vmatpush.msra.mxu0 0.0
      %815 = vmatpush.msra.mxu0 0.0
      %816 = vmatpush.msra.mxu0 0.0
      %817 = vmatpush.msra.mxu0 0.0
      %818 = vmatpush.msra.mxu0 0.0
      %819 = vmatpush.msra.mxu0 0.0
      %820 = vmatpush.msra.mxu0 0.0
      %821 = vmatpush.msra.mxu0 0.0
      %822 = vmatpush.msra.mxu0 0.0
      %823 = vmatpush.msra.mxu0 0.0
      %824 = vmatpush.msra.mxu0 0.0
      %825 = vmatpush.msra.mxu0 0.0
      %826 = vmatpush.msra.mxu0 0.0
      %827 = vmatpush.msra.mxu0 %v810
      %828 = vmatmul.f32.gmra.mxu0 %v808
      %v829 = vpop.f32.mrf.mxu0
      %v830 = vadd.f32 0.0, %v829
      %831 = vdwg.mxu0
      %833 = vrot.lane.b32.xlu0 %v696, 8
      %v834 = vpop.permute.xlu0 %833
      %837 = vrot.lane.b32.xlu0 %v763, 16
      %v838 = vpop.permute.xlu0 %837
      %841 = vrot.lane.b32.xlu0 %v830, 24
      %v842 = vpop.permute.xlu0 %841
      %v844 = vsel %vm560, %v629, %v834
      %vm845 = vcmask 130048
      %v846 = vsel %vm845, %v844, %v838
      %vm847 = vcmask 195584
      %v848 = vsel %vm847, %v846, %v842
      %v849 = vld [vmem:[%s6] sm:$0xff]
      %v850 = vld [vmem:[%s6 + $0x8] sm:$0xff]
      %v851 = vld [vmem:[%s6 + $0x10] sm:$0xff]
      %v852 = vld [vmem:[%s6 + $0x18] sm:$0xff]
      %v854 = vsel %vm527, %v848, 0
      %856 = vmatpush.msra.mxu0 0.0
      %857 = vmatpush.msra.mxu0 0.0
      %858 = vmatpush.msra.mxu0 0.0
      %859 = vmatpush.msra.mxu0 0.0
      %860 = vmatpush.msra.mxu0 0.0
      %861 = vmatpush.msra.mxu0 0.0
      %862 = vmatpush.msra.mxu0 0.0
      %863 = vmatpush.msra.mxu0 0.0
      %864 = vmatpush.msra.mxu0 0.0
      %865 = vmatpush.msra.mxu0 0.0
      %866 = vmatpush.msra.mxu0 0.0
      %867 = vmatpush.msra.mxu0 0.0
      %868 = vmatpush.msra.mxu0 %v852
      %869 = vmatpush.msra.mxu0 %v851
      %870 = vmatpush.msra.mxu0 %v850
      %871 = vmatpush.msra.mxu0 %v849
      %872 = vmatmul.f32.gmra.mxu0 %v854
      %v873 = vpop.f32.mrf.mxu0
      %v874 = vadd.f32 0.0, %v873
      %875 = vdwg.mxu0
      %v876 = vadd.f32 %v477, %v874
      %v877 = vld [vmem:[%s7] sm:$0x1]
      %v879 = vperm.slane %v877, 0
      %v881 = vadd.f32 %v876, %v879
      %v882 = vld [vmem:[%s8] sm:$0x1]
      %v883 = vld [vmem:[%s9] sm:$0x1]
      %v884 = vsel %vm481, %v881, 0.0
      %885 = vadd.xlane.f32.xlu0 %v884
      %v886 = vpop.xlane.xlu0 %885
      %v887 = vmul.f32 %v886, %v491
      %v888 = vsub.f32 %v881, %v887
      %v889 = vmul.f32 %v888, %v888
      %v890 = vsel %vm481, %v889, 0.0
      %891 = vadd.xlane.f32.xlu0 %v890
      %v892 = vpop.xlane.xlu0 %891
      %v893 = vmul.f32 %v892, %v491
      %v894 = vadd.f32 %v893, 1e-12
      %v895 = vrsqrt.pop %v894
      %v896 = vmul.f32 %v895, %v894
      %v897 = vmul.f32 %v896, %v895
      %v898 = vmul.f32 0.5, %v897
      %v899 = vsub.f32 1.5, %v898
      %v900 = vmul.f32 %v895, %v899
      %vm901 = vweird.f32 %v894
      %vm902 = vweird.f32 %v895
      %vm903 = vmor %vm901, %vm902
      %v904 = vsel %vm903, %v895, %v900
      %v905 = vmul.f32 %v888, %v904
      %v907 = vperm.slane %v882, 0
      %v909 = vmul.f32 %v905, %v907
      %v911 = vperm.slane %v883, 0
      %v913 = vadd.f32 %v909, %v911
      %v914 = vld [vmem:[%s10] sm:$0xff]
      %v915 = vld [vmem:[%s10 + $0x8] sm:$0xff]
      %v916 = vld [vmem:[%s10 + $0x10] sm:$0xff]
      %v917 = vld [vmem:[%s10 + $0x18] sm:$0xff]
      %v918 = vld [vmem:[%s11] sm:$0x1]
      %v920 = vperm.slane %v918, 0
      %v923 = vsel %vm527, %v913, 0
      %925 = vmatpush.msra.mxu0 0.0
      %926 = vmatpush.msra.mxu0 0.0
      %927 = vmatpush.msra.mxu0 0.0
      %928 = vmatpush.msra.mxu0 0.0
      %929 = vmatpush.msra.mxu0 0.0
      %930 = vmatpush.msra.mxu0 0.0
      %931 = vmatpush.msra.mxu0 0.0
      %932 = vmatpush.msra.mxu0 0.0
      %933 = vmatpush.msra.mxu0 0.0
      %934 = vmatpush.msra.mxu0 0.0
      %935 = vmatpush.msra.mxu0 0.0
      %936 = vmatpush.msra.mxu0 0.0
      %937 = vmatpush.msra.mxu0 %v917
      %938 = vmatpush.msra.mxu0 %v916
      %939 = vmatpush.msra.mxu0 %v915
      %940 = vmatpush.msra.mxu0 %v914
      %941 = vmatmul.f32.gmra.mxu0 %v923
      %v942 = vpop.f32.mrf.mxu0
      %v943 = vadd.f32 %v920, %v942
      %944 = vdwg.mxu0
      %v945 = vmax.f32 %v943, 0.0
      %v946 = vld [vmem:[%s12] sm:$0xff]
      %v947 = vld [vmem:[%s12 + $0x8] sm:$0xff]
      %v948 = vld [vmem:[%s12 + $0x10] sm:$0xff]
      %v949 = vld [vmem:[%s12 + $0x18] sm:$0xff]
      %v950 = vld [vmem:[%s12 + $0x20] sm:$0xff]
      %v951 = vld [vmem:[%s12 + $0x28] sm:$0xff]
      %v952 = vld [vmem:[%s13] sm:$0x1]
      %v954 = vperm.slane %v952, 0
      %vm956 = vcmask 392192
      %v958 = vsel %vm956, %v945, 0
      %960 = vmatpush.msra.mxu0 0.0
      %961 = vmatpush.msra.mxu0 0.0
      %962 = vmatpush.msra.mxu0 0.0
      %963 = vmatpush.msra.mxu0 0.0
      %964 = vmatpush.msra.mxu0 0.0
      %965 = vmatpush.msra.mxu0 0.0
      %966 = vmatpush.msra.mxu0 0.0
      %967 = vmatpush.msra.mxu0 0.0
      %968 = vmatpush.msra.mxu0 0.0
      %969 = vmatpush.msra.mxu0 0.0
      %970 = vmatpush.msra.mxu0 %v951
      %971 = vmatpush.msra.mxu0 %v950
      %972 = vmatpush.msra.mxu0 %v949
      %973 = vmatpush.msra.mxu0 %v948
      %974 = vmatpush.msra.mxu0 %v947
      %975 = vmatpush.msra.mxu0 %v946
      %976 = vmatmul.f32.gmra.mxu0 %v958
      %v977 = vpop.f32.mrf.mxu0
      %v978 = vadd.f32 %v954, %v977
      %979 = vdwg.mxu0
      %v980 = vadd.f32 %v881, %v978
      %981 = vst.msk [vmem:[%s476] sm:$0xf] %vm481, %v980
      %p982 = scmp.lt.s32.totalorder %s25, 1
      %s983 = scalar_select %p982, %s25, 1
      %s984 = smul.addr %s983, 4
      %s985 = scalar_lea.vmem %s14, %s984
      // Predicated region
      $region77: #{_lambda_.9} parent=75 // pred_check
        %p986 = pneg %p347
      $region78: #{_lambda_.9} parent=75 // pred_check_branch
        %988 = sbr.rel (%p986) target = $region80
      $region79: #{_lambda_.9} parent=75 // pred_region
        _
      $region80: #{_lambda_.9} parent=75 // pred_fallthru
        _
    $region76: #{_lambda_.9} parent=5 // pred_fallthru
      _
    %p989 = scmp.le.s32.totalorder 2, %s20
    // Predicated region
    $region81: #{_lambda_.9} parent=5 // pred_check
      %p990 = pneg %p989
    $region82: #{_lambda_.9} parent=5 // pred_check_branch
      %992 = sbr.rel (%p990) target = $region84
    $region83: #{_lambda_.9} parent=5 // pred_region
      %s993 = ssub.s32 %s20, 2
      // Predicated region
      $region85: #{_lambda_.9} parent=83 // pred_check
        %p994 = pneg %p353
      $region86: #{_lambda_.9} parent=83 // pred_check_branch
        %996 = sbr.rel (%p994) target = $region88
      $region87: #{_lambda_.9} parent=83 // pred_region
        %p997 = scmp.lt.s32.totalorder %s26, 1
        %s998 = scalar_select %p997, %s26, 1
        %s999 = smul.addr %s998, 4
        %s1000 = scalar_lea.vmem %s14, %s999
      $region88: #{_lambda_.9} parent=83 // pred_fallthru
        _
    $region84: #{_lambda_.9} parent=5 // pred_fallthru
      _
  $region6: #{_lambda_.9} parent=0 // loop_footer
    %s24 = sadd.s32 1, %s20
  $region7: #{_lambda_.9} parent=0 // loop_footer_branch
    %19 = sbr.rel target = $region3
  $region8: #{_lambda_.9} parent=0 // loop_exit
    _

</llo_original>
